<compile_context>
chip_gen: v7x
topology: tpu7x:2x2x1
jax: 0.10.0
libtpu: 0.0.40
codegen_flags: <defaults>
</compile_context>

<pallas_src>
import functools
import math

import jax
import jax.numpy as jnp
from jax import lax
from jax.experimental import pallas as pl
from jax.experimental.pallas import tpu as pltpu

EPS = 1e-12  # BERT layer_norm_eps


# --------------------------------------------------------------------------
# tiling / VMEM helpers
# --------------------------------------------------------------------------
def _round_up(x, m):
    return ((x + m - 1) // m) * m


def _row_tile(n, target=512):
    # second-to-last block dim must be divisible by 8 or equal the full dim.
    return n if n <= target else target          # 512 % 8 == 0


def _col_tile(n, target=1024):
    # last block dim must be divisible by 128 or equal the full dim; pick the
    # largest divisor of n among {target, 512, 256, 128} so edge blocks are
    # never partial.
    if n <= target:
        return n
    for t in (target, 512, 256, 128):
        if n % t == 0:
            return t
    return n


def _vmem_limit_bytes():
    # ~3/4 of physical VMEM, capped at 96 MiB:
    #   v5e / v6e (128 MiB physical) -> 96 MiB,  v7x (64 MiB per TC) -> 48 MiB.
    # Falls back to a safe-everywhere 48 MiB if the query is unavailable.
    try:
        cap = pltpu.get_tpu_info().vmem_capacity_bytes
    except Exception:
        cap = 64 << 20
    return int(min(cap * 3 // 4, 96 << 20))


_VMEM_LIMIT = _vmem_limit_bytes()
_PAR1 = pltpu.CompilerParams(dimension_semantics=("parallel",),
                             vmem_limit_bytes=_VMEM_LIMIT)
_PAR_RED = pltpu.CompilerParams(dimension_semantics=("parallel", "arbitrary"),
                                vmem_limit_bytes=_VMEM_LIMIT)


# --------------------------------------------------------------------------
# Pallas kernels (all LN / softmax statistics in f32; MXU acc in f32)
# --------------------------------------------------------------------------
def _ln_f32(h, g, b, eps):
    mu = jnp.mean(h, axis=-1, keepdims=True)
    var = jnp.mean(jnp.square(h - mu), axis=-1, keepdims=True)
    return (h - mu) * lax.rsqrt(var + eps) * g + b


def _attn_block_kernel(x_ref, g_ref, b_ref, wqkv_ref, bqkv_ref, m_ref,
                       xln_ref, ctx_ref, *, scale, eps, H):
    """Embedding-LN + fused QKV projection + single-head attention (per batch)."""
    dt = ctx_ref.dtype
    x = x_ref[0].astype(jnp.float32)                        # [L, H]
    xln = _ln_f32(x, g_ref[...], b_ref[...], eps)
    xln_lo = xln.astype(dt)
    xln_ref[0] = xln_lo                                     # residual for out-proj LN
    qkv = (jnp.dot(xln_lo, wqkv_ref[...],
                   preferred_element_type=jnp.float32) + bqkv_ref[...])  # [L, 3H]
    q = qkv[:, :H].astype(dt)
    k = qkv[:, H:2 * H].astype(dt)
    v = qkv[:, 2 * H:].astype(dt)
    # contract on axis 1 of both operands -> no explicit transpose / XLU copy
    s = lax.dot_general(q, k, (((1,), (1,)), ((), ())),
                        preferred_element_type=jnp.float32) * scale
    mask = m_ref[0]                                         # [1, L], 1.0 = attend
    s = s + (1.0 - mask) * (-1e9)
    s = s - jnp.max(s, axis=-1, keepdims=True)
    p = jnp.exp(s)
    p = p * pl.reciprocal(jnp.sum(p, axis=-1, keepdims=True), approx=True)
    ctx_ref[0] = jnp.dot(p.astype(dt), v,
                         preferred_element_type=jnp.float32).astype(dt)


def _proj_add_ln_kernel(a_ref, r_ref, w_ref, b_ref, g_ref, bln_ref, o_ref, *, eps):
    h = (jnp.dot(a_ref[...], w_ref[...], preferred_element_type=jnp.float32)
         + b_ref[...])
    h = h + r_ref[...].astype(jnp.float32)
    o_ref[...] = _ln_f32(h, g_ref[...], bln_ref[...], eps).astype(o_ref.dtype)


def _ffn_kernel(x_ref, w1_ref, b1_ref, w2_ref, b2_ref, g_ref, bln_ref,
                o_ref, acc_ref, *, eps):
    """FFN streamed over the intermediate dim (grid axis 1, 'arbitrary')."""
    j = pl.program_id(1)

    @pl.when(j == 0)
    def _():
        acc_ref[...] = jnp.zeros_like(acc_ref)

    x = x_ref[...]
    h = (jnp.dot(x, w1_ref[...], preferred_element_type=jnp.float32)
         + b1_ref[...])
    h = jax.nn.gelu(h, approximate=True)                    # [TM, TF] stays in VMEM
    acc_ref[...] += jnp.dot(h.astype(x.dtype), w2_ref[...],
                            preferred_element_type=jnp.float32)

    @pl.when(j == pl.num_programs(1) - 1)
    def _():
        hf = acc_ref[...] + b2_ref[...] + x.astype(jnp.float32)
        o_ref[...] = _ln_f32(hf, g_ref[...], bln_ref[...], eps).astype(o_ref.dtype)


def _fusion_kernel(hz_ref, sm_ref, ym_ref, sd_ref, wpsm_ref, wpym_ref, wpsd_ref,
                   bp_ref, wm1_ref, wm2_ref, bm_ref, g_ref, b_ref, o_ref, *, eps):
    dt = hz_ref.dtype
    # pinyin_map: Linear(H, H) on concat(sm, ym, sd) -> three dots, no HBM concat
    py = (jnp.dot(sm_ref[...], wpsm_ref[...], preferred_element_type=jnp.float32)
          + jnp.dot(ym_ref[...], wpym_ref[...], preferred_element_type=jnp.float32)
          + jnp.dot(sd_ref[...], wpsd_ref[...], preferred_element_type=jnp.float32)
          + bp_ref[...])
    # map_fc: Linear(2H, H) on concat(hanzi, new_pinyin); weight split in two
    h = (jnp.dot(hz_ref[...], wm1_ref[...], preferred_element_type=jnp.float32)
         + jnp.dot(py.astype(dt), wm2_ref[...], preferred_element_type=jnp.float32)
         + bm_ref[...])
    # dropout: eval-mode identity
    o_ref[...] = _ln_f32(h, g_ref[...], b_ref[...], eps).astype(o_ref.dtype)


def _head_transform_kernel(x_ref, wt_ref, bt_ref, g_ref, b_ref, o_ref, *, eps):
    # BertPredictionHeadTransform: dense -> gelu -> LayerNorm
    h = (jnp.dot(x_ref[...], wt_ref[...], preferred_element_type=jnp.float32)
         + bt_ref[...])
    h = jax.nn.gelu(h, approximate=True)
    o_ref[...] = _ln_f32(h, g_ref[...], b_ref[...], eps).astype(o_ref.dtype)


def _proj_kernel(x_ref, w_ref, b_ref, o_ref):
    o_ref[...] = (jnp.dot(x_ref[...], w_ref[...], preferred_element_type=jnp.float32)
                  + b_ref[...]).astype(o_ref.dtype)


# --------------------------------------------------------------------------
# pallas_call wrappers (row-tiled, weights pinned, parallel grid axes)
# --------------------------------------------------------------------------
def attn_block(emb, g, b, wqkv, bqkv, mask, scale, eps=EPS):
    """Fused embedding-LN + QKV + attention.  grid=(B,), >=2 steps for B>=2."""
    B, L, H = emb.shape
    row = pl.BlockSpec((1, L, H), lambda i: (i, 0, 0))
    vec = pl.BlockSpec((1, H), lambda i: (0, 0))
    out_sd = jax.ShapeDtypeStruct((B, L, H), emb.dtype)
    xln, ctx = pl.pallas_call(
        functools.partial(_attn_block_kernel, scale=scale, eps=eps, H=H),
        out_shape=(out_sd, out_sd),
        grid=(B,),
        in_specs=[row, vec, vec,
                  pl.BlockSpec((H, 3 * H), lambda i: (0, 0)),
                  pl.BlockSpec((1, 3 * H), lambda i: (0, 0)),
                  pl.BlockSpec((1, 1, L), lambda i: (i, 0, 0))],
        out_specs=(pl.BlockSpec((1, L, H), lambda i: (i, 0, 0)),
                   pl.BlockSpec((1, L, H), lambda i: (i, 0, 0))),
        compiler_params=_PAR1,
    )(emb, g.reshape(1, -1), b.reshape(1, -1), wqkv, bqkv.reshape(1, -1), mask)
    return xln, ctx


def proj_add_layernorm(a, res, w, b, g, bln, eps=EPS):
    N, H = a.shape
    TM = _row_tile(N)
    return pl.pallas_call(
        functools.partial(_proj_add_ln_kernel, eps=eps),
        out_shape=jax.ShapeDtypeStruct((N, H), a.dtype),
        grid=(pl.cdiv(N, TM),),
        in_specs=[pl.BlockSpec((TM, H), lambda i: (i, 0)),
                  pl.BlockSpec((TM, H), lambda i: (i, 0)),
                  pl.BlockSpec((H, H), lambda i: (0, 0)),
                  pl.BlockSpec((1, H), lambda i: (0, 0)),
                  pl.BlockSpec((1, H), lambda i: (0, 0)),
                  pl.BlockSpec((1, H), lambda i: (0, 0))],
        out_specs=pl.BlockSpec((TM, H), lambda i: (i, 0)),
        compiler_params=_PAR1,
    )(a, res, w, b.reshape(1, -1), g.reshape(1, -1), bln.reshape(1, -1))


def ffn_block(x, w1, b1, w2, b2, g, bln, eps=EPS):
    """dense -> gelu -> dense -> +residual -> LN, F streamed in TF-column slabs."""
    N, H = x.shape
    F = w1.shape[1]
    TM = _row_tile(N)
    TF = _col_tile(F, 1024)          # divisor of F -> no partial edge blocks
    return pl.pallas_call(
        functools.partial(_ffn_kernel, eps=eps),
        out_shape=jax.ShapeDtypeStruct((N, H), x.dtype),
        grid=(pl.cdiv(N, TM), F // TF),
        in_specs=[pl.BlockSpec((TM, H), lambda i, j: (i, 0)),
                  pl.BlockSpec((H, TF), lambda i, j: (0, j)),
                  pl.BlockSpec((1, TF), lambda i, j: (0, j)),
                  pl.BlockSpec((TF, H), lambda i, j: (j, 0)),
                  pl.BlockSpec((1, H), lambda i, j: (0, 0)),
                  pl.BlockSpec((1, H), lambda i, j: (0, 0)),
                  pl.BlockSpec((1, H), lambda i, j: (0, 0))],
        out_specs=pl.BlockSpec((TM, H), lambda i, j: (i, 0)),
        scratch_shapes=[pltpu.VMEM((TM, H), jnp.float32)],
        compiler_params=_PAR_RED,
    )(x, w1, b1.reshape(1, -1), w2, b2.reshape(1, -1),
      g.reshape(1, -1), bln.reshape(1, -1))


def fusion(hanzi2d, sm2d, ym2d, sd2d, p, eps=EPS):
    N, H = hanzi2d.shape
    P = sm2d.shape[1]
    TM = _row_tile(N)
    row_h = pl.BlockSpec((TM, H), lambda i: (i, 0))
    row_p = pl.BlockSpec((TM, P), lambda i: (i, 0))
    w_ph = pl.BlockSpec((P, H), lambda i: (0, 0))
    w_hh = pl.BlockSpec((H, H), lambda i: (0, 0))
    vec = pl.BlockSpec((1, H), lambda i: (0, 0))
    return pl.pallas_call(
        functools.partial(_fusion_kernel, eps=eps),
        out_shape=jax.ShapeDtypeStruct((N, H), hanzi2d.dtype),
        grid=(pl.cdiv(N, TM),),
        in_specs=[row_h, row_p, row_p, row_p,
                  w_ph, w_ph, w_ph, vec,
                  w_hh, w_hh, vec, vec, vec],
        out_specs=pl.BlockSpec((TM, H), lambda i: (i, 0)),
        compiler_params=_PAR1,
    )(hanzi2d, sm2d, ym2d, sd2d,
      p["wp_sm"], p["wp_ym"], p["wp_sd"], p["bp"].reshape(1, -1),
      p["wm1"], p["wm2"], p["bm"].reshape(1, -1),
      p["ln_g"].reshape(1, -1), p["ln_b"].reshape(1, -1))


def head_transform(x, wt, bt, g, b, eps=EPS):
    N, H = x.shape
    TM = _row_tile(N)
    return pl.pallas_call(
        functools.partial(_head_transform_kernel, eps=eps),
        out_shape=jax.ShapeDtypeStruct((N, H), x.dtype),
        grid=(pl.cdiv(N, TM),),
        in_specs=[pl.BlockSpec((TM, H), lambda i: (i, 0)),
                  pl.BlockSpec((H, H), lambda i: (0, 0)),
                  pl.BlockSpec((1, H), lambda i: (0, 0)),
                  pl.BlockSpec((1, H), lambda i: (0, 0)),
                  pl.BlockSpec((1, H), lambda i: (0, 0))],
        out_specs=pl.BlockSpec((TM, H), lambda i: (i, 0)),
        compiler_params=_PAR1,
    )(x, wt, bt.reshape(1, -1), g.reshape(1, -1), b.reshape(1, -1))


def projection(x, w, b, out_dtype=jnp.bfloat16):
    """(row-outer, vocab-inner)-tiled output projection.

    `w` / `b` must be pre-padded to a multiple of 128 lanes (done once at
    init); the padded output is returned (bf16 logits; f32 MXU accumulation).
    """
    N, H = x.shape
    Mp = w.shape[1]
    assert Mp % 128 == 0 or Mp == w.shape[1]
    TM = _row_tile(N)
    TV = _col_tile(Mp, 1024)
    ce = pl.CostEstimate(
        flops=int(2 * N * H * Mp), transcendentals=0,
        bytes_accessed=int(N * H * x.dtype.itemsize
                           + pl.cdiv(N, TM) * H * Mp * w.dtype.itemsize
                           + Mp * 4 + N * Mp * jnp.dtype(out_dtype).itemsize))
    return pl.pallas_call(
        _proj_kernel,
        out_shape=jax.ShapeDtypeStruct((N, Mp), out_dtype),
        grid=(pl.cdiv(N, TM), Mp // TV),     # vocab innermost: x tile stays resident
        in_specs=[pl.BlockSpec((TM, H), lambda i, j: (i, 0)),
                  pl.BlockSpec((H, TV), lambda i, j: (0, j)),
                  pl.BlockSpec((1, TV), lambda i, j: (0, j))],
        out_specs=pl.BlockSpec((TM, TV), lambda i, j: (i, j)),
        compiler_params=_PAR_RED,
        cost_estimate=ce,
    )(x, w, b.reshape(1, -1))


# --------------------------------------------------------------------------
# Parameters (deterministic, synthetic; bf16 matmul weights, f32 biases/LN)
# --------------------------------------------------------------------------
def init_params(key, V, H, P, L, FFN, wdtype=jnp.bfloat16):
    keys = iter(jax.random.split(key, 32))

    def w(shape):
        return (jax.random.normal(next(keys), shape, jnp.float32) * 0.02).astype(wdtype)

    def z(shape):
        return jnp.zeros(shape, jnp.float32)

    def o(shape):
        return jnp.ones(shape, jnp.float32)

    def pad_cols(wm, bv):
        M = wm.shape[1]
        Mp = _round_up(M, 128)
        if Mp != M:       # pre-pad once at init (no per-forward jnp.pad of H x V)
            wm = jnp.pad(wm, ((0, 0), (0, Mp - M)))
            bv = jnp.pad(bv, (0, Mp - M))
        return wm, bv

    cls_wd, cls_bd = pad_cols(w((H, V)), z((V,)))
    det_wd, det_bd = pad_cols(w((H, 2)), z((2,)))

    return dict(
        # stand-in BERT encoder
        word_emb=w((V, H)), pos_emb=w((L, H)),
        emb_ln_g=o((H,)), emb_ln_b=z((H,)),
        wqkv=w((H, 3 * H)), bqkv=z((3 * H,)),          # fused q|k|v projection
        wo=w((H, H)), bo=z((H,)),
        attn_ln_g=o((H,)), attn_ln_b=z((H,)),
        wff1=w((H, FFN)), bff1=z((FFN,)), wff2=w((FFN, H)), bff2=z((H,)),
        ffn_ln_g=o((H,)), ffn_ln_b=z((H,)),
        # HanziModel-specific layers
        wp_sm=w((P, H)), wp_ym=w((P, H)), wp_sd=w((P, H)), bp=z((H,)),  # pinyin_map
        wm1=w((H, H)), wm2=w((H, H)), bm=z((H,)),      # map_fc (Linear(2H, H) split)
        ln_g=o((H,)), ln_b=z((H,)),                    # self.layernorm
        # cls = BertOnlyMLMHead (decoder weight pre-padded to 128-lane multiple)
        cls_wt=w((H, H)), cls_bt=z((H,)), cls_ln_g=o((H,)), cls_ln_b=z((H,)),
        cls_wd=cls_wd, cls_bd=cls_bd,
        # det_transform + detector (is_multitask)
        det_wt=w((H, H)), det_bt=z((H,)), det_ln_g=o((H,)), det_ln_b=z((H,)),
        det_wd=det_wd, det_bd=det_bd,
    )


# --------------------------------------------------------------------------
# Forward pass (mirrors HanziModel.forward)
# --------------------------------------------------------------------------
@functools.partial(jax.jit, static_argnames=("vocab_size", "is_multitask"))
def hanzi_forward(p, input_ids, attention_mask, pinyin_hidden_states, *,
                  vocab_size, is_multitask=True):
    B, L = input_ids.shape
    H = p["word_emb"].shape[1]

    # ---- self.bert(...)  (stand-in single-layer encoder) ----
    emb = jnp.take(p["word_emb"], input_ids, axis=0) + p["pos_emb"][None, :L, :]
    mask = attention_mask.astype(jnp.float32).reshape(B, 1, L)
    # fused: embedding LN + QKV (one [H,3H] matmul) + attention; q/k/v stay in VMEM
    xln, ctx = attn_block(emb, p["emb_ln_g"], p["emb_ln_b"],
                          p["wqkv"], p["bqkv"], mask, scale=1.0 / math.sqrt(H))
    xln2d = xln.reshape(B * L, H)
    h1 = proj_add_layernorm(ctx.reshape(B * L, H), xln2d, p["wo"], p["bo"],
                            p["attn_ln_g"], p["attn_ln_b"])
    hanzi_hidden = ffn_block(h1, p["wff1"], p["bff1"], p["wff2"], p["bff2"],
                             p["ffn_ln_g"], p["ffn_ln_b"])          # [B*L, H] bf16

    # ---- pinyin index_select (glue); concat happens inside the fusion kernel ----
    sm_idx = jnp.array([0] + [3 * i + 1 for i in range(L - 2)] + [3 * L - 5], jnp.int32)
    ym_idx = jnp.array([0] + [3 * i + 2 for i in range(L - 2)] + [3 * L - 5], jnp.int32)
    sd_idx = jnp.array([0] + [3 * i + 3 for i in range(L - 2)] + [3 * L - 5], jnp.int32)
    pin = pinyin_hidden_states.astype(hanzi_hidden.dtype)
    P = pin.shape[-1]
    sm = jnp.take(pin, sm_idx, axis=1).reshape(B * L, P)
    ym = jnp.take(pin, ym_idx, axis=1).reshape(B * L, P)
    sd = jnp.take(pin, sd_idx, axis=1).reshape(B * L, P)

    # ---- pinyin_map -> map_fc -> layernorm -> dropout (fused Pallas kernel) ----
    hidden = fusion(hanzi_hidden, sm, ym, sd, p)                     # [B*L, H]

    # ---- cls (MLM head): transform kernel + vocab-tiled projection (bf16 logits)
    cor_hid = head_transform(hidden, p["cls_wt"], p["cls_bt"],
                             p["cls_ln_g"], p["cls_ln_b"])
    cor_pad = projection(cor_hid, p["cls_wd"], p["cls_bd"])
    # TODO(synk): at real vocab sizes keep the 128-padded logits downstream
    # (feed the loss the padded width) to avoid this XLA slice-copy.
    cor_out = cor_pad[:, :vocab_size].reshape(B, L, vocab_size)
    if not is_multitask:
        return cor_out, None

    # ---- detector head (output width 2, padded to 128 lanes inside the kernel)
    det_hid = head_transform(hidden, p["det_wt"], p["det_bt"],
                             p["det_ln_g"], p["det_ln_b"])
    det_out = projection(det_hid, p["det_wd"], p["det_bd"])[:, :2].reshape(B, L, 2)
    return cor_out, det_out


# --------------------------------------------------------------------------
if __name__ == "__main__":
    B, L, H, P, V, FFN = 2, 8, 48, 16, 64, 96     # 3*P == H, pinyin_len = 3L-4
    key = jax.random.PRNGKey(0)
    k_par, k_ids, k_pin = jax.random.split(key, 3)

    params = init_params(k_par, V, H, P, L, FFN)
    input_ids = jax.random.randint(k_ids, (B, L), 0, V, dtype=jnp.int32)
    attention_mask = jnp.ones((B, L), jnp.int32)
    pinyin_hidden_states = jax.random.normal(k_pin, (B, 3 * L - 4, P), jnp.float32)

    cor_out, det_out = hanzi_forward(params, input_ids, attention_mask,
                                     pinyin_hidden_states,
                                     vocab_size=V, is_multitask=True)
    jax.block_until_ready((cor_out, det_out))
    assert cor_out.shape == (B, L, V) and det_out.shape == (B, L, 2)
    print("KERNEL_OK")
</pallas_src>

<mosaic_0001>
module attributes {stable_mosaic.version = 11 : i64} {
  func.func @_ffn_kernel(%arg0: i32, %arg1: i32, %arg2: memref<16x48xbf16, #tpu.memory_space<vmem>>, %arg3: memref<48x96xbf16, #tpu.memory_space<vmem>>, %arg4: memref<1x96xf32, #tpu.memory_space<vmem>>, %arg5: memref<96x48xbf16, #tpu.memory_space<vmem>>, %arg6: memref<1x48xf32, #tpu.memory_space<vmem>>, %arg7: memref<1x48xf32, #tpu.memory_space<vmem>>, %arg8: memref<1x48xf32, #tpu.memory_space<vmem>>, %arg9: memref<16x48xbf16, #tpu.memory_space<vmem>>, %arg10: memref<16x48xf32, #tpu.memory_space<vmem>>) attributes {dimension_semantics = [#tpu.dimension_semantics<parallel>, #tpu.dimension_semantics<arbitrary>], iteration_bounds = array<i64: 1, 1>, scalar_prefetch = 0 : i64, scratch_operands = 1 : i64, tpu.core_type = #tpu.core_type<tc>, window_params = [{transform_indices = @transform_0, window_bounds = array<i64: 16, 48>}, {transform_indices = @transform_1, window_bounds = array<i64: 48, 96>}, {transform_indices = @transform_2, window_bounds = array<i64: 1, 96>}, {transform_indices = @transform_3, window_bounds = array<i64: 96, 48>}, {pipeline_mode = #tpu.pipeline_mode<synchronous>, transform_indices = @transform_4, window_bounds = array<i64: 1, 48>}, {pipeline_mode = #tpu.pipeline_mode<synchronous>, transform_indices = @transform_5, window_bounds = array<i64: 1, 48>}, {pipeline_mode = #tpu.pipeline_mode<synchronous>, transform_indices = @transform_6, window_bounds = array<i64: 1, 48>}, {transform_indices = @transform_7, window_bounds = array<i64: 16, 48>}]} {
    %c0_i32 = arith.constant 0 : i32
    %0 = arith.cmpi eq, %arg1, %c0_i32 : i32
    %1 = arith.extui %0 : i1 to i32
    %c0_i32_0 = arith.constant 0 : i32
    %2 = arith.cmpi ne, %1, %c0_i32_0 : i32
    scf.if %2 {
      %cst_19 = arith.constant 0.000000e+00 : f32
      %31 = vector.broadcast %cst_19 : f32 to vector<16x48xf32>
      %c0_20 = arith.constant 0 : index
      %c0_21 = arith.constant 0 : index
      %32 = vector.load %arg10[%c0_20, %c0_21] : memref<16x48xf32, #tpu.memory_space<vmem>>, vector<16x48xf32>
      tpu.vector_store %arg10[%c0_20, %c0_21], %31 {strides = array<i32>} : memref<16x48xf32, #tpu.memory_space<vmem>>, vector<16x48xf32>,
    } else {
    }
    %c0 = arith.constant 0 : index
    %c0_1 = arith.constant 0 : index
    %3 = vector.load %arg2[%c0, %c0_1] : memref<16x48xbf16, #tpu.memory_space<vmem>>, vector<16x48xbf16>
    %c0_2 = arith.constant 0 : index
    %c0_3 = arith.constant 0 : index
    %4 = vector.load %arg3[%c0_2, %c0_3] : memref<48x96xbf16, #tpu.memory_space<vmem>>, vector<48x96xbf16>
    %cst = arith.constant dense<0.000000e+00> : vector<16x96xf32>
    %5 = tpu.matmul %3, %4, %cst {dimension_numbers = #tpu.dot_dimension_numbers<[1], [0], [0], [1], [0, 0, 1, 1], [], []>} : vector<16x48xbf16>, vector<48x96xbf16>, vector<16x96xf32> -> vector<16x96xf32>
    %c0_4 = arith.constant 0 : index
    %c0_5 = arith.constant 0 : index
    %6 = vector.load %arg4[%c0_4, %c0_5] : memref<1x96xf32, #tpu.memory_space<vmem>>, vector<1x96xf32>
    %7 = vector.broadcast %6 : vector<1x96xf32> to vector<16x96xf32>
    %8 = arith.addf %5, %7 : vector<16x96xf32>
    %9 = arith.mulf %8, %8 : vector<16x96xf32>
    %10 = arith.mulf %8, %9 : vector<16x96xf32>
    %cst_6 = arith.constant 4.471500e-02 : f32
    %11 = vector.broadcast %cst_6 : f32 to vector<16x96xf32>
    %12 = arith.mulf %11, %10 : vector<16x96xf32>
    %13 = arith.addf %8, %12 : vector<16x96xf32>
    %cst_7 = arith.constant 0.797884583 : f32
    %14 = vector.broadcast %cst_7 : f32 to vector<16x96xf32>
    %15 = arith.mulf %14, %13 : vector<16x96xf32>
    %16 = math.tanh %15 : vector<16x96xf32>
    %cst_8 = arith.constant 1.000000e+00 : f32
    %17 = vector.broadcast %cst_8 : f32 to vector<16x96xf32>
    %18 = arith.addf %17, %16 : vector<16x96xf32>
    %cst_9 = arith.constant 5.000000e-01 : f32
    %19 = vector.broadcast %cst_9 : f32 to vector<16x96xf32>
    %20 = arith.mulf %19, %18 : vector<16x96xf32>
    %21 = arith.mulf %8, %20 : vector<16x96xf32>
    %c0_10 = arith.constant 0 : index
    %c0_11 = arith.constant 0 : index
    %22 = vector.load %arg10[%c0_10, %c0_11] : memref<16x48xf32, #tpu.memory_space<vmem>>, vector<16x48xf32>
    %23 = arith.truncf %21 : vector<16x96xf32> to vector<16x96xbf16>
    %c0_12 = arith.constant 0 : index
    %c0_13 = arith.constant 0 : index
    %24 = vector.load %arg5[%c0_12, %c0_13] : memref<96x48xbf16, #tpu.memory_space<vmem>>, vector<96x48xbf16>
    %cst_14 = arith.constant dense<0.000000e+00> : vector<16x48xf32>
    %25 = tpu.matmul %23, %24, %cst_14 {dimension_numbers = #tpu.dot_dimension_numbers<[1], [0], [0], [1], [0, 0, 1, 1], [], []>} : vector<16x96xbf16>, vector<96x48xbf16>, vector<16x48xf32> -> vector<16x48xf32>
    %26 = arith.addf %22, %25 : vector<16x48xf32>
    %c0_15 = arith.constant 0 : index
    %c0_16 = arith.constant 0 : index
    %27 = vector.load %arg10[%c0_15, %c0_16] : memref<16x48xf32, #tpu.memory_space<vmem>>, vector<16x48xf32>
    tpu.vector_store %arg10[%c0_15, %c0_16], %26 {strides = array<i32>} : memref<16x48xf32, #tpu.memory_space<vmem>>, vector<16x48xf32>,
    %c0_i32_17 = arith.constant 0 : i32
    %28 = arith.cmpi eq, %arg1, %c0_i32_17 : i32
    %29 = arith.extui %28 : i1 to i32
    %c0_i32_18 = arith.constant 0 : i32
    %30 = arith.cmpi ne, %29, %c0_i32_18 : i32
    scf.if %30 {
      %c0_19 = arith.constant 0 : index
      %c0_20 = arith.constant 0 : index
      %31 = vector.load %arg10[%c0_19, %c0_20] : memref<16x48xf32, #tpu.memory_space<vmem>>, vector<16x48xf32>
      %c0_21 = arith.constant 0 : index
      %c0_22 = arith.constant 0 : index
      %32 = vector.load %arg6[%c0_21, %c0_22] : memref<1x48xf32, #tpu.memory_space<vmem>>, vector<1x48xf32>
      %33 = vector.broadcast %32 : vector<1x48xf32> to vector<16x48xf32>
      %34 = arith.addf %31, %33 : vector<16x48xf32>
      %35 = arith.extf %3 : vector<16x48xbf16> to vector<16x48xf32>
      %36 = arith.addf %34, %35 : vector<16x48xf32>
      %c0_23 = arith.constant 0 : index
      %c0_24 = arith.constant 0 : index
      %37 = vector.load %arg7[%c0_23, %c0_24] : memref<1x48xf32, #tpu.memory_space<vmem>>, vector<1x48xf32>
      %c0_25 = arith.constant 0 : index
      %c0_26 = arith.constant 0 : index
      %38 = vector.load %arg8[%c0_25, %c0_26] : memref<1x48xf32, #tpu.memory_space<vmem>>, vector<1x48xf32>
      %cst_27 = arith.constant dense<0.000000e+00> : vector<16xf32>
      %39 = vector.multi_reduction <add>, %36, %cst_27 [1] : vector<16x48xf32> to vector<16xf32>
      %40 = vector.shape_cast %39 : vector<16xf32> to vector<16x1xf32>
      %cst_28 = arith.constant 4.800000e+01 : f32
      %41 = vector.broadcast %cst_28 : f32 to vector<16x1xf32>
      %42 = arith.divf %40, %41 : vector<16x1xf32>
      %43 = vector.broadcast %42 : vector<16x1xf32> to vector<16x48xf32>
      %44 = arith.subf %36, %43 : vector<16x48xf32>
      %45 = arith.mulf %44, %44 : vector<16x48xf32>
      %cst_29 = arith.constant dense<0.000000e+00> : vector<16xf32>
      %46 = vector.multi_reduction <add>, %45, %cst_29 [1] : vector<16x48xf32> to vector<16xf32>
      %47 = vector.shape_cast %46 : vector<16xf32> to vector<16x1xf32>
      %cst_30 = arith.constant 4.800000e+01 : f32
      %48 = vector.broadcast %cst_30 : f32 to vector<16x1xf32>
      %49 = arith.divf %47, %48 : vector<16x1xf32>
      %50 = vector.broadcast %42 : vector<16x1xf32> to vector<16x48xf32>
      %51 = arith.subf %36, %50 : vector<16x48xf32>
      %cst_31 = arith.constant 9.99999996E-13 : f32
      %52 = vector.broadcast %cst_31 : f32 to vector<16x1xf32>
      %53 = arith.addf %49, %52 : vector<16x1xf32>
      %54 = math.rsqrt %53 : vector<16x1xf32>
      %55 = vector.broadcast %54 : vector<16x1xf32> to vector<16x48xf32>
      %56 = arith.mulf %51, %55 : vector<16x48xf32>
      %57 = vector.broadcast %37 : vector<1x48xf32> to vector<16x48xf32>
      %58 = arith.mulf %56, %57 : vector<16x48xf32>
      %59 = vector.broadcast %38 : vector<1x48xf32> to vector<16x48xf32>
      %60 = arith.addf %58, %59 : vector<16x48xf32>
      %61 = arith.truncf %60 : vector<16x48xf32> to vector<16x48xbf16>
      %c0_32 = arith.constant 0 : index
      %c0_33 = arith.constant 0 : index
      %62 = vector.load %arg9[%c0_32, %c0_33] : memref<16x48xbf16, #tpu.memory_space<vmem>>, vector<16x48xbf16>
      tpu.vector_store %arg9[%c0_32, %c0_33], %61 {strides = array<i32>} : memref<16x48xbf16, #tpu.memory_space<vmem>>, vector<16x48xbf16>,
    } else {
    }
    return
  }
  func.func @transform_0(%arg0: i32, %arg1: i32) -> (i32, i32) {
    %c0_i32 = arith.constant 0 : i32
    %c0_i32_0 = arith.constant 0 : i32
    return %arg0, %c0_i32 : i32, i32
  }
  func.func @transform_1(%arg0: i32, %arg1: i32) -> (i32, i32) {
    %c0_i32 = arith.constant 0 : i32
    %c0_i32_0 = arith.constant 0 : i32
    return %c0_i32, %arg1 : i32, i32
  }
  func.func @transform_2(%arg0: i32, %arg1: i32) -> (i32, i32) {
    %c0_i32 = arith.constant 0 : i32
    %c0_i32_0 = arith.constant 0 : i32
    return %c0_i32, %arg1 : i32, i32
  }
  func.func @transform_3(%arg0: i32, %arg1: i32) -> (i32, i32) {
    %c0_i32 = arith.constant 0 : i32
    %c0_i32_0 = arith.constant 0 : i32
    return %arg1, %c0_i32 : i32, i32
  }
  func.func @transform_4(%arg0: i32, %arg1: i32) -> (i32, i32) {
    %c0_i32 = arith.constant 0 : i32
    %c0_i32_0 = arith.constant 0 : i32
    %c0_i32_1 = arith.constant 0 : i32
    return %c0_i32, %c0_i32_0 : i32, i32
  }
  func.func @transform_5(%arg0: i32, %arg1: i32) -> (i32, i32) {
    %c0_i32 = arith.constant 0 : i32
    %c0_i32_0 = arith.constant 0 : i32
    %c0_i32_1 = arith.constant 0 : i32
    return %c0_i32, %c0_i32_0 : i32, i32
  }
  func.func @transform_6(%arg0: i32, %arg1: i32) -> (i32, i32) {
    %c0_i32 = arith.constant 0 : i32
    %c0_i32_0 = arith.constant 0 : i32
    %c0_i32_1 = arith.constant 0 : i32
    return %c0_i32, %c0_i32_0 : i32, i32
  }
  func.func @transform_7(%arg0: i32, %arg1: i32) -> (i32, i32) {
    %c0_i32 = arith.constant 0 : i32
    %c0_i32_0 = arith.constant 0 : i32
    return %arg0, %c0_i32 : i32, i32
  }
}

module attributes {stable_mosaic.version = 11 : i64} {
  func.func @_attn_block_kernel(%arg0: i32, %arg1: memref<1x8x48xbf16, #tpu.memory_space<vmem>>, %arg2: memref<1x48xf32, #tpu.memory_space<vmem>>, %arg3: memref<1x48xf32, #tpu.memory_space<vmem>>, %arg4: memref<48x144xbf16, #tpu.memory_space<vmem>>, %arg5: memref<1x144xf32, #tpu.memory_space<vmem>>, %arg6: memref<1x1x8xf32, #tpu.memory_space<vmem>>, %arg7: memref<1x8x48xbf16, #tpu.memory_space<vmem>>, %arg8: memref<1x8x48xbf16, #tpu.memory_space<vmem>>) attributes {dimension_semantics = [#tpu.dimension_semantics<parallel>], iteration_bounds = array<i64: 2>, scalar_prefetch = 0 : i64, scratch_operands = 0 : i64, tpu.core_type = #tpu.core_type<tc>, window_params = [{transform_indices = @transform_0, window_bounds = array<i64: 1, 8, 48>}, {pipeline_mode = #tpu.pipeline_mode<synchronous>, transform_indices = @transform_1, window_bounds = array<i64: 1, 48>}, {pipeline_mode = #tpu.pipeline_mode<synchronous>, transform_indices = @transform_2, window_bounds = array<i64: 1, 48>}, {pipeline_mode = #tpu.pipeline_mode<synchronous>, transform_indices = @transform_3, window_bounds = array<i64: 48, 144>}, {pipeline_mode = #tpu.pipeline_mode<synchronous>, transform_indices = @transform_4, window_bounds = array<i64: 1, 144>}, {transform_indices = @transform_5, window_bounds = array<i64: 1, 1, 8>}, {transform_indices = @transform_6, window_bounds = array<i64: 1, 8, 48>}, {transform_indices = @transform_7, window_bounds = array<i64: 1, 8, 48>}]} {
    %c0 = arith.constant 0 : index
    %c0_0 = arith.constant 0 : index
    %c0_1 = arith.constant 0 : index
    %0 = vector.load %arg1[%c0, %c0_0, %c0_1] : memref<1x8x48xbf16, #tpu.memory_space<vmem>>, vector<1x8x48xbf16>
    %1 = vector.shape_cast %0 : vector<1x8x48xbf16> to vector<8x48xbf16>
    %2 = arith.extf %1 : vector<8x48xbf16> to vector<8x48xf32>
    %c0_2 = arith.constant 0 : index
    %c0_3 = arith.constant 0 : index
    %3 = vector.load %arg2[%c0_2, %c0_3] : memref<1x48xf32, #tpu.memory_space<vmem>>, vector<1x48xf32>
    %c0_4 = arith.constant 0 : index
    %c0_5 = arith.constant 0 : index
    %4 = vector.load %arg3[%c0_4, %c0_5] : memref<1x48xf32, #tpu.memory_space<vmem>>, vector<1x48xf32>
    %cst = arith.constant dense<0.000000e+00> : vector<8xf32>
    %5 = vector.multi_reduction <add>, %2, %cst [1] : vector<8x48xf32> to vector<8xf32>
    %6 = vector.shape_cast %5 : vector<8xf32> to vector<8x1xf32>
    %cst_6 = arith.constant 4.800000e+01 : f32
    %7 = vector.broadcast %cst_6 : f32 to vector<8x1xf32>
    %8 = arith.divf %6, %7 : vector<8x1xf32>
    %9 = vector.broadcast %8 : vector<8x1xf32> to vector<8x48xf32>
    %10 = arith.subf %2, %9 : vector<8x48xf32>
    %11 = arith.mulf %10, %10 : vector<8x48xf32>
    %cst_7 = arith.constant dense<0.000000e+00> : vector<8xf32>
    %12 = vector.multi_reduction <add>, %11, %cst_7 [1] : vector<8x48xf32> to vector<8xf32>
    %13 = vector.shape_cast %12 : vector<8xf32> to vector<8x1xf32>
    %cst_8 = arith.constant 4.800000e+01 : f32
    %14 = vector.broadcast %cst_8 : f32 to vector<8x1xf32>
    %15 = arith.divf %13, %14 : vector<8x1xf32>
    %16 = vector.broadcast %8 : vector<8x1xf32> to vector<8x48xf32>
    %17 = arith.subf %2, %16 : vector<8x48xf32>
    %cst_9 = arith.constant 9.99999996E-13 : f32
    %18 = vector.broadcast %cst_9 : f32 to vector<8x1xf32>
    %19 = arith.addf %15, %18 : vector<8x1xf32>
    %20 = math.rsqrt %19 : vector<8x1xf32>
    %21 = vector.broadcast %20 : vector<8x1xf32> to vector<8x48xf32>
    %22 = arith.mulf %17, %21 : vector<8x48xf32>
    %23 = vector.broadcast %3 : vector<1x48xf32> to vector<8x48xf32>
    %24 = arith.mulf %22, %23 : vector<8x48xf32>
    %25 = vector.broadcast %4 : vector<1x48xf32> to vector<8x48xf32>
    %26 = arith.addf %24, %25 : vector<8x48xf32>
    %27 = arith.truncf %26 : vector<8x48xf32> to vector<8x48xbf16>
    %c0_10 = arith.constant 0 : index
    %c0_11 = arith.constant 0 : index
    %c0_12 = arith.constant 0 : index
    %28 = vector.load %arg7[%c0_10, %c0_11, %c0_12] : memref<1x8x48xbf16, #tpu.memory_space<vmem>>, vector<1x8x48xbf16>
    %29 = vector.shape_cast %28 : vector<1x8x48xbf16> to vector<8x48xbf16>
    %30 = vector.shape_cast %27 : vector<8x48xbf16> to vector<1x8x48xbf16>
    tpu.vector_store %arg7[%c0_10, %c0_11, %c0_12], %30 {strides = array<i32>} : memref<1x8x48xbf16, #tpu.memory_space<vmem>>, vector<1x8x48xbf16>,
    %c0_13 = arith.constant 0 : index
    %c0_14 = arith.constant 0 : index
    %31 = vector.load %arg4[%c0_13, %c0_14] : memref<48x144xbf16, #tpu.memory_space<vmem>>, vector<48x144xbf16>
    %cst_15 = arith.constant dense<0.000000e+00> : vector<8x144xf32>
    %32 = tpu.matmul %27, %31, %cst_15 {dimension_numbers = #tpu.dot_dimension_numbers<[1], [0], [0], [1], [0, 0, 1, 1], [], []>} : vector<8x48xbf16>, vector<48x144xbf16>, vector<8x144xf32> -> vector<8x144xf32>
    %c0_16 = arith.constant 0 : index
    %c0_17 = arith.constant 0 : index
    %33 = vector.load %arg5[%c0_16, %c0_17] : memref<1x144xf32, #tpu.memory_space<vmem>>, vector<1x144xf32>
    %34 = vector.broadcast %33 : vector<1x144xf32> to vector<8x144xf32>
    %35 = arith.addf %32, %34 : vector<8x144xf32>
    %36 = vector.extract_strided_slice %35 {offsets = [0, 0], sizes = [8, 48], strides = [1, 1]} : vector<8x144xf32> to vector<8x48xf32>
    %37 = arith.truncf %36 : vector<8x48xf32> to vector<8x48xbf16>
    %38 = vector.extract_strided_slice %35 {offsets = [0, 48], sizes = [8, 48], strides = [1, 1]} : vector<8x144xf32> to vector<8x48xf32>
    %39 = arith.truncf %38 : vector<8x48xf32> to vector<8x48xbf16>
    %40 = vector.extract_strided_slice %35 {offsets = [0, 96], sizes = [8, 48], strides = [1, 1]} : vector<8x144xf32> to vector<8x48xf32>
    %41 = arith.truncf %40 : vector<8x48xf32> to vector<8x48xbf16>
    %cst_18 = arith.constant dense<0.000000e+00> : vector<8x8xf32>
    %42 = tpu.matmul %37, %39, %cst_18 {dimension_numbers = #tpu.dot_dimension_numbers<[1], [1], [0], [0], [0, 0, 1, 0], [], []>} : vector<8x48xbf16>, vector<8x48xbf16>, vector<8x8xf32> -> vector<8x8xf32>
    %cst_19 = arith.constant 0.144337565 : f32
    %43 = vector.broadcast %cst_19 : f32 to vector<8x8xf32>
    %44 = arith.mulf %42, %43 : vector<8x8xf32>
    %c0_20 = arith.constant 0 : index
    %c0_21 = arith.constant 0 : index
    %c0_22 = arith.constant 0 : index
    %45 = vector.load %arg6[%c0_20, %c0_21, %c0_22] : memref<1x1x8xf32, #tpu.memory_space<vmem>>, vector<1x1x8xf32>
    %46 = vector.shape_cast %45 : vector<1x1x8xf32> to vector<1x8xf32>
    %cst_23 = arith.constant 1.000000e+00 : f32
    %47 = vector.broadcast %cst_23 : f32 to vector<1x8xf32>
    %48 = arith.subf %47, %46 : vector<1x8xf32>
    %cst_24 = arith.constant -1.000000e+09 : f32
    %49 = vector.broadcast %cst_24 : f32 to vector<1x8xf32>
    %50 = arith.mulf %48, %49 : vector<1x8xf32>
    %51 = vector.broadcast %50 : vector<1x8xf32> to vector<8x8xf32>
    %52 = arith.addf %44, %51 : vector<8x8xf32>
    %cst_25 = arith.constant dense<0xFF800000> : vector<8xf32>
    %53 = vector.multi_reduction <maximumf>, %52, %cst_25 [1] : vector<8x8xf32> to vector<8xf32>
    %54 = vector.shape_cast %53 : vector<8xf32> to vector<8x1xf32>
    %55 = vector.broadcast %54 : vector<8x1xf32> to vector<8x8xf32>
    %56 = arith.subf %52, %55 : vector<8x8xf32>
    %57 = math.exp %56 : vector<8x8xf32>
    %cst_26 = arith.constant dense<0.000000e+00> : vector<8xf32>
    %58 = vector.multi_reduction <add>, %57, %cst_26 [1] : vector<8x8xf32> to vector<8xf32>
    %59 = vector.shape_cast %58 : vector<8xf32> to vector<8x1xf32>
    %60 = tpu.reciprocal %59 {approx = true} : vector<8x1xf32> -> vector<8x1xf32>
    %61 = vector.broadcast %60 : vector<8x1xf32> to vector<8x8xf32>
    %62 = arith.mulf %57, %61 : vector<8x8xf32>
    %63 = arith.truncf %62 : vector<8x8xf32> to vector<8x8xbf16>
    %cst_27 = arith.constant dense<0.000000e+00> : vector<8x48xf32>
    %64 = tpu.matmul %63, %41, %cst_27 {dimension_numbers = #tpu.dot_dimension_numbers<[1], [0], [0], [1], [0, 0, 1, 1], [], []>} : vector<8x8xbf16>, vector<8x48xbf16>, vector<8x48xf32> -> vector<8x48xf32>
    %65 = arith.truncf %64 : vector<8x48xf32> to vector<8x48xbf16>
    %c0_28 = arith.constant 0 : index
    %c0_29 = arith.constant 0 : index
    %c0_30 = arith.constant 0 : index
    %66 = vector.load %arg8[%c0_28, %c0_29, %c0_30] : memref<1x8x48xbf16, #tpu.memory_space<vmem>>, vector<1x8x48xbf16>
    %67 = vector.shape_cast %66 : vector<1x8x48xbf16> to vector<8x48xbf16>
    %68 = vector.shape_cast %65 : vector<8x48xbf16> to vector<1x8x48xbf16>
    tpu.vector_store %arg8[%c0_28, %c0_29, %c0_30], %68 {strides = array<i32>} : memref<1x8x48xbf16, #tpu.memory_space<vmem>>, vector<1x8x48xbf16>,
    return
  }
  func.func @transform_0(%arg0: i32) -> (i32, i32, i32) {
    %c0_i32 = arith.constant 0 : i32
    %c0_i32_0 = arith.constant 0 : i32
    %c0_i32_1 = arith.constant 0 : i32
    return %arg0, %c0_i32, %c0_i32_0 : i32, i32, i32
  }
  func.func @transform_1(%arg0: i32) -> (i32, i32) {
    %c0_i32 = arith.constant 0 : i32
    %c0_i32_0 = arith.constant 0 : i32
    %c0_i32_1 = arith.constant 0 : i32
    return %c0_i32, %c0_i32_0 : i32, i32
  }
  func.func @transform_2(%arg0: i32) -> (i32, i32) {
    %c0_i32 = arith.constant 0 : i32
    %c0_i32_0 = arith.constant 0 : i32
    %c0_i32_1 = arith.constant 0 : i32
    return %c0_i32, %c0_i32_0 : i32, i32
  }
  func.func @transform_3(%arg0: i32) -> (i32, i32) {
    %c0_i32 = arith.constant 0 : i32
    %c0_i32_0 = arith.constant 0 : i32
    %c0_i32_1 = arith.constant 0 : i32
    return %c0_i32, %c0_i32_0 : i32, i32
  }
  func.func @transform_4(%arg0: i32) -> (i32, i32) {
    %c0_i32 = arith.constant 0 : i32
    %c0_i32_0 = arith.constant 0 : i32
    %c0_i32_1 = arith.constant 0 : i32
    return %c0_i32, %c0_i32_0 : i32, i32
  }
  func.func @transform_5(%arg0: i32) -> (i32, i32, i32) {
    %c0_i32 = arith.constant 0 : i32
    %c0_i32_0 = arith.constant 0 : i32
    %c0_i32_1 = arith.constant 0 : i32
    return %arg0, %c0_i32, %c0_i32_0 : i32, i32, i32
  }
  func.func @transform_6(%arg0: i32) -> (i32, i32, i32) {
    %c0_i32 = arith.constant 0 : i32
    %c0_i32_0 = arith.constant 0 : i32
    %c0_i32_1 = arith.constant 0 : i32
    return %arg0, %c0_i32, %c0_i32_0 : i32, i32, i32
  }
  func.func @transform_7(%arg0: i32) -> (i32, i32, i32) {
    %c0_i32 = arith.constant 0 : i32
    %c0_i32_0 = arith.constant 0 : i32
    %c0_i32_1 = arith.constant 0 : i32
    return %arg0, %c0_i32, %c0_i32_0 : i32, i32, i32
  }
}

module attributes {stable_mosaic.version = 11 : i64} {
  func.func @_proj_add_ln_kernel(%arg0: i32, %arg1: memref<16x48xbf16, #tpu.memory_space<vmem>>, %arg2: memref<16x48xbf16, #tpu.memory_space<vmem>>, %arg3: memref<48x48xbf16, #tpu.memory_space<vmem>>, %arg4: memref<1x48xf32, #tpu.memory_space<vmem>>, %arg5: memref<1x48xf32, #tpu.memory_space<vmem>>, %arg6: memref<1x48xf32, #tpu.memory_space<vmem>>, %arg7: memref<16x48xbf16, #tpu.memory_space<vmem>>) attributes {dimension_semantics = [#tpu.dimension_semantics<parallel>], iteration_bounds = array<i64: 1>, scalar_prefetch = 0 : i64, scratch_operands = 0 : i64, tpu.core_type = #tpu.core_type<tc>, window_params = [{transform_indices = @transform_0, window_bounds = array<i64: 16, 48>}, {transform_indices = @transform_1, window_bounds = array<i64: 16, 48>}, {pipeline_mode = #tpu.pipeline_mode<synchronous>, transform_indices = @transform_2, window_bounds = array<i64: 48, 48>}, {pipeline_mode = #tpu.pipeline_mode<synchronous>, transform_indices = @transform_3, window_bounds = array<i64: 1, 48>}, {pipeline_mode = #tpu.pipeline_mode<synchronous>, transform_indices = @transform_4, window_bounds = array<i64: 1, 48>}, {pipeline_mode = #tpu.pipeline_mode<synchronous>, transform_indices = @transform_5, window_bounds = array<i64: 1, 48>}, {transform_indices = @transform_6, window_bounds = array<i64: 16, 48>}]} {
    %c0 = arith.constant 0 : index
    %c0_0 = arith.constant 0 : index
    %0 = vector.load %arg1[%c0, %c0_0] : memref<16x48xbf16, #tpu.memory_space<vmem>>, vector<16x48xbf16>
    %c0_1 = arith.constant 0 : index
    %c0_2 = arith.constant 0 : index
    %1 = vector.load %arg3[%c0_1, %c0_2] : memref<48x48xbf16, #tpu.memory_space<vmem>>, vector<48x48xbf16>
    %cst = arith.constant dense<0.000000e+00> : vector<16x48xf32>
    %2 = tpu.matmul %0, %1, %cst {dimension_numbers = #tpu.dot_dimension_numbers<[1], [0], [0], [1], [0, 0, 1, 1], [], []>} : vector<16x48xbf16>, vector<48x48xbf16>, vector<16x48xf32> -> vector<16x48xf32>
    %c0_3 = arith.constant 0 : index
    %c0_4 = arith.constant 0 : index
    %3 = vector.load %arg4[%c0_3, %c0_4] : memref<1x48xf32, #tpu.memory_space<vmem>>, vector<1x48xf32>
    %4 = vector.broadcast %3 : vector<1x48xf32> to vector<16x48xf32>
    %5 = arith.addf %2, %4 : vector<16x48xf32>
    %c0_5 = arith.constant 0 : index
    %c0_6 = arith.constant 0 : index
    %6 = vector.load %arg2[%c0_5, %c0_6] : memref<16x48xbf16, #tpu.memory_space<vmem>>, vector<16x48xbf16>
    %7 = arith.extf %6 : vector<16x48xbf16> to vector<16x48xf32>
    %8 = arith.addf %5, %7 : vector<16x48xf32>
    %c0_7 = arith.constant 0 : index
    %c0_8 = arith.constant 0 : index
    %9 = vector.load %arg5[%c0_7, %c0_8] : memref<1x48xf32, #tpu.memory_space<vmem>>, vector<1x48xf32>
    %c0_9 = arith.constant 0 : index
    %c0_10 = arith.constant 0 : index
    %10 = vector.load %arg6[%c0_9, %c0_10] : memref<1x48xf32, #tpu.memory_space<vmem>>, vector<1x48xf32>
    %cst_11 = arith.constant dense<0.000000e+00> : vector<16xf32>
    %11 = vector.multi_reduction <add>, %8, %cst_11 [1] : vector<16x48xf32> to vector<16xf32>
    %12 = vector.shape_cast %11 : vector<16xf32> to vector<16x1xf32>
    %cst_12 = arith.constant 4.800000e+01 : f32
    %13 = vector.broadcast %cst_12 : f32 to vector<16x1xf32>
    %14 = arith.divf %12, %13 : vector<16x1xf32>
    %15 = vector.broadcast %14 : vector<16x1xf32> to vector<16x48xf32>
    %16 = arith.subf %8, %15 : vector<16x48xf32>
    %17 = arith.mulf %16, %16 : vector<16x48xf32>
    %cst_13 = arith.constant dense<0.000000e+00> : vector<16xf32>
    %18 = vector.multi_reduction <add>, %17, %cst_13 [1] : vector<16x48xf32> to vector<16xf32>
    %19 = vector.shape_cast %18 : vector<16xf32> to vector<16x1xf32>
    %cst_14 = arith.constant 4.800000e+01 : f32
    %20 = vector.broadcast %cst_14 : f32 to vector<16x1xf32>
    %21 = arith.divf %19, %20 : vector<16x1xf32>
    %22 = vector.broadcast %14 : vector<16x1xf32> to vector<16x48xf32>
    %23 = arith.subf %8, %22 : vector<16x48xf32>
    %cst_15 = arith.constant 9.99999996E-13 : f32
    %24 = vector.broadcast %cst_15 : f32 to vector<16x1xf32>
    %25 = arith.addf %21, %24 : vector<16x1xf32>
    %26 = math.rsqrt %25 : vector<16x1xf32>
    %27 = vector.broadcast %26 : vector<16x1xf32> to vector<16x48xf32>
    %28 = arith.mulf %23, %27 : vector<16x48xf32>
    %29 = vector.broadcast %9 : vector<1x48xf32> to vector<16x48xf32>
    %30 = arith.mulf %28, %29 : vector<16x48xf32>
    %31 = vector.broadcast %10 : vector<1x48xf32> to vector<16x48xf32>
    %32 = arith.addf %30, %31 : vector<16x48xf32>
    %33 = arith.truncf %32 : vector<16x48xf32> to vector<16x48xbf16>
    %c0_16 = arith.constant 0 : index
    %c0_17 = arith.constant 0 : index
    %34 = vector.load %arg7[%c0_16, %c0_17] : memref<16x48xbf16, #tpu.memory_space<vmem>>, vector<16x48xbf16>
    tpu.vector_store %arg7[%c0_16, %c0_17], %33 {strides = array<i32>} : memref<16x48xbf16, #tpu.memory_space<vmem>>, vector<16x48xbf16>,
    return
  }
  func.func @transform_0(%arg0: i32) -> (i32, i32) {
    %c0_i32 = arith.constant 0 : i32
    %c0_i32_0 = arith.constant 0 : i32
    return %arg0, %c0_i32 : i32, i32
  }
  func.func @transform_1(%arg0: i32) -> (i32, i32) {
    %c0_i32 = arith.constant 0 : i32
    %c0_i32_0 = arith.constant 0 : i32
    return %arg0, %c0_i32 : i32, i32
  }
  func.func @transform_2(%arg0: i32) -> (i32, i32) {
    %c0_i32 = arith.constant 0 : i32
    %c0_i32_0 = arith.constant 0 : i32
    %c0_i32_1 = arith.constant 0 : i32
    return %c0_i32, %c0_i32_0 : i32, i32
  }
  func.func @transform_3(%arg0: i32) -> (i32, i32) {
    %c0_i32 = arith.constant 0 : i32
    %c0_i32_0 = arith.constant 0 : i32
    %c0_i32_1 = arith.constant 0 : i32
    return %c0_i32, %c0_i32_0 : i32, i32
  }
  func.func @transform_4(%arg0: i32) -> (i32, i32) {
    %c0_i32 = arith.constant 0 : i32
    %c0_i32_0 = arith.constant 0 : i32
    %c0_i32_1 = arith.constant 0 : i32
    return %c0_i32, %c0_i32_0 : i32, i32
  }
  func.func @transform_5(%arg0: i32) -> (i32, i32) {
    %c0_i32 = arith.constant 0 : i32
    %c0_i32_0 = arith.constant 0 : i32
    %c0_i32_1 = arith.constant 0 : i32
    return %c0_i32, %c0_i32_0 : i32, i32
  }
  func.func @transform_6(%arg0: i32) -> (i32, i32) {
    %c0_i32 = arith.constant 0 : i32
    %c0_i32_0 = arith.constant 0 : i32
    return %arg0, %c0_i32 : i32, i32
  }
}

module attributes {stable_mosaic.version = 11 : i64} {
  func.func @_fusion_kernel(%arg0: i32, %arg1: memref<16x48xbf16, #tpu.memory_space<vmem>>, %arg2: memref<16x16xbf16, #tpu.memory_space<vmem>>, %arg3: memref<16x16xbf16, #tpu.memory_space<vmem>>, %arg4: memref<16x16xbf16, #tpu.memory_space<vmem>>, %arg5: memref<16x48xbf16, #tpu.memory_space<vmem>>, %arg6: memref<16x48xbf16, #tpu.memory_space<vmem>>, %arg7: memref<16x48xbf16, #tpu.memory_space<vmem>>, %arg8: memref<1x48xf32, #tpu.memory_space<vmem>>, %arg9: memref<48x48xbf16, #tpu.memory_space<vmem>>, %arg10: memref<48x48xbf16, #tpu.memory_space<vmem>>, %arg11: memref<1x48xf32, #tpu.memory_space<vmem>>, %arg12: memref<1x48xf32, #tpu.memory_space<vmem>>, %arg13: memref<1x48xf32, #tpu.memory_space<vmem>>, %arg14: memref<16x48xbf16, #tpu.memory_space<vmem>>) attributes {dimension_semantics = [#tpu.dimension_semantics<parallel>], iteration_bounds = array<i64: 1>, scalar_prefetch = 0 : i64, scratch_operands = 0 : i64, tpu.core_type = #tpu.core_type<tc>, window_params = [{transform_indices = @transform_0, window_bounds = array<i64: 16, 48>}, {transform_indices = @transform_1, window_bounds = array<i64: 16, 16>}, {transform_indices = @transform_2, window_bounds = array<i64: 16, 16>}, {transform_indices = @transform_3, window_bounds = array<i64: 16, 16>}, {pipeline_mode = #tpu.pipeline_mode<synchronous>, transform_indices = @transform_4, window_bounds = array<i64: 16, 48>}, {pipeline_mode = #tpu.pipeline_mode<synchronous>, transform_indices = @transform_5, window_bounds = array<i64: 16, 48>}, {pipeline_mode = #tpu.pipeline_mode<synchronous>, transform_indices = @transform_6, window_bounds = array<i64: 16, 48>}, {pipeline_mode = #tpu.pipeline_mode<synchronous>, transform_indices = @transform_7, window_bounds = array<i64: 1, 48>}, {pipeline_mode = #tpu.pipeline_mode<synchronous>, transform_indices = @transform_8, window_bounds = array<i64: 48, 48>}, {pipeline_mode = #tpu.pipeline_mode<synchronous>, transform_indices = @transform_9, window_bounds = array<i64: 48, 48>}, {pipeline_mode = #tpu.pipeline_mode<synchronous>, transform_indices = @transform_10, window_bounds = array<i64: 1, 48>}, {pipeline_mode = #tpu.pipeline_mode<synchronous>, transform_indices = @transform_11, window_bounds = array<i64: 1, 48>}, {pipeline_mode = #tpu.pipeline_mode<synchronous>, transform_indices = @transform_12, window_bounds = array<i64: 1, 48>}, {transform_indices = @transform_13, window_bounds = array<i64: 16, 48>}]} {
    %c0 = arith.constant 0 : index
    %c0_0 = arith.constant 0 : index
    %0 = vector.load %arg2[%c0, %c0_0] : memref<16x16xbf16, #tpu.memory_space<vmem>>, vector<16x16xbf16>
    %c0_1 = arith.constant 0 : index
    %c0_2 = arith.constant 0 : index
    %1 = vector.load %arg5[%c0_1, %c0_2] : memref<16x48xbf16, #tpu.memory_space<vmem>>, vector<16x48xbf16>
    %cst = arith.constant dense<0.000000e+00> : vector<16x48xf32>
    %2 = tpu.matmul %0, %1, %cst {dimension_numbers = #tpu.dot_dimension_numbers<[1], [0], [0], [1], [0, 0, 1, 1], [], []>} : vector<16x16xbf16>, vector<16x48xbf16>, vector<16x48xf32> -> vector<16x48xf32>
    %c0_3 = arith.constant 0 : index
    %c0_4 = arith.constant 0 : index
    %3 = vector.load %arg3[%c0_3, %c0_4] : memref<16x16xbf16, #tpu.memory_space<vmem>>, vector<16x16xbf16>
    %c0_5 = arith.constant 0 : index
    %c0_6 = arith.constant 0 : index
    %4 = vector.load %arg6[%c0_5, %c0_6] : memref<16x48xbf16, #tpu.memory_space<vmem>>, vector<16x48xbf16>
    %cst_7 = arith.constant dense<0.000000e+00> : vector<16x48xf32>
    %5 = tpu.matmul %3, %4, %cst_7 {dimension_numbers = #tpu.dot_dimension_numbers<[1], [0], [0], [1], [0, 0, 1, 1], [], []>} : vector<16x16xbf16>, vector<16x48xbf16>, vector<16x48xf32> -> vector<16x48xf32>
    %6 = arith.addf %2, %5 : vector<16x48xf32>
    %c0_8 = arith.constant 0 : index
    %c0_9 = arith.constant 0 : index
    %7 = vector.load %arg4[%c0_8, %c0_9] : memref<16x16xbf16, #tpu.memory_space<vmem>>, vector<16x16xbf16>
    %c0_10 = arith.constant 0 : index
    %c0_11 = arith.constant 0 : index
    %8 = vector.load %arg7[%c0_10, %c0_11] : memref<16x48xbf16, #tpu.memory_space<vmem>>, vector<16x48xbf16>
    %cst_12 = arith.constant dense<0.000000e+00> : vector<16x48xf32>
    %9 = tpu.matmul %7, %8, %cst_12 {dimension_numbers = #tpu.dot_dimension_numbers<[1], [0], [0], [1], [0, 0, 1, 1], [], []>} : vector<16x16xbf16>, vector<16x48xbf16>, vector<16x48xf32> -> vector<16x48xf32>
    %10 = arith.addf %6, %9 : vector<16x48xf32>
    %c0_13 = arith.constant 0 : index
    %c0_14 = arith.constant 0 : index
    %11 = vector.load %arg8[%c0_13, %c0_14] : memref<1x48xf32, #tpu.memory_space<vmem>>, vector<1x48xf32>
    %12 = vector.broadcast %11 : vector<1x48xf32> to vector<16x48xf32>
    %13 = arith.addf %10, %12 : vector<16x48xf32>
    %c0_15 = arith.constant 0 : index
    %c0_16 = arith.constant 0 : index
    %14 = vector.load %arg1[%c0_15, %c0_16] : memref<16x48xbf16, #tpu.memory_space<vmem>>, vector<16x48xbf16>
    %c0_17 = arith.constant 0 : index
    %c0_18 = arith.constant 0 : index
    %15 = vector.load %arg9[%c0_17, %c0_18] : memref<48x48xbf16, #tpu.memory_space<vmem>>, vector<48x48xbf16>
    %cst_19 = arith.constant dense<0.000000e+00> : vector<16x48xf32>
    %16 = tpu.matmul %14, %15, %cst_19 {dimension_numbers = #tpu.dot_dimension_numbers<[1], [0], [0], [1], [0, 0, 1, 1], [], []>} : vector<16x48xbf16>, vector<48x48xbf16>, vector<16x48xf32> -> vector<16x48xf32>
    %17 = arith.truncf %13 : vector<16x48xf32> to vector<16x48xbf16>
    %c0_20 = arith.constant 0 : index
    %c0_21 = arith.constant 0 : index
    %18 = vector.load %arg10[%c0_20, %c0_21] : memref<48x48xbf16, #tpu.memory_space<vmem>>, vector<48x48xbf16>
    %cst_22 = arith.constant dense<0.000000e+00> : vector<16x48xf32>
    %19 = tpu.matmul %17, %18, %cst_22 {dimension_numbers = #tpu.dot_dimension_numbers<[1], [0], [0], [1], [0, 0, 1, 1], [], []>} : vector<16x48xbf16>, vector<48x48xbf16>, vector<16x48xf32> -> vector<16x48xf32>
    %20 = arith.addf %16, %19 : vector<16x48xf32>
    %c0_23 = arith.constant 0 : index
    %c0_24 = arith.constant 0 : index
    %21 = vector.load %arg11[%c0_23, %c0_24] : memref<1x48xf32, #tpu.memory_space<vmem>>, vector<1x48xf32>
    %22 = vector.broadcast %21 : vector<1x48xf32> to vector<16x48xf32>
    %23 = arith.addf %20, %22 : vector<16x48xf32>
    %c0_25 = arith.constant 0 : index
    %c0_26 = arith.constant 0 : index
    %24 = vector.load %arg12[%c0_25, %c0_26] : memref<1x48xf32, #tpu.memory_space<vmem>>, vector<1x48xf32>
    %c0_27 = arith.constant 0 : index
    %c0_28 = arith.constant 0 : index
    %25 = vector.load %arg13[%c0_27, %c0_28] : memref<1x48xf32, #tpu.memory_space<vmem>>, vector<1x48xf32>
    %cst_29 = arith.constant dense<0.000000e+00> : vector<16xf32>
    %26 = vector.multi_reduction <add>, %23, %cst_29 [1] : vector<16x48xf32> to vector<16xf32>
    %27 = vector.shape_cast %26 : vector<16xf32> to vector<16x1xf32>
    %cst_30 = arith.constant 4.800000e+01 : f32
    %28 = vector.broadcast %cst_30 : f32 to vector<16x1xf32>
    %29 = arith.divf %27, %28 : vector<16x1xf32>
    %30 = vector.broadcast %29 : vector<16x1xf32> to vector<16x48xf32>
    %31 = arith.subf %23, %30 : vector<16x48xf32>
    %32 = arith.mulf %31, %31 : vector<16x48xf32>
    %cst_31 = arith.constant dense<0.000000e+00> : vector<16xf32>
    %33 = vector.multi_reduction <add>, %32, %cst_31 [1] : vector<16x48xf32> to vector<16xf32>
    %34 = vector.shape_cast %33 : vector<16xf32> to vector<16x1xf32>
    %cst_32 = arith.constant 4.800000e+01 : f32
    %35 = vector.broadcast %cst_32 : f32 to vector<16x1xf32>
    %36 = arith.divf %34, %35 : vector<16x1xf32>
    %37 = vector.broadcast %29 : vector<16x1xf32> to vector<16x48xf32>
    %38 = arith.subf %23, %37 : vector<16x48xf32>
    %cst_33 = arith.constant 9.99999996E-13 : f32
    %39 = vector.broadcast %cst_33 : f32 to vector<16x1xf32>
    %40 = arith.addf %36, %39 : vector<16x1xf32>
    %41 = math.rsqrt %40 : vector<16x1xf32>
    %42 = vector.broadcast %41 : vector<16x1xf32> to vector<16x48xf32>
    %43 = arith.mulf %38, %42 : vector<16x48xf32>
    %44 = vector.broadcast %24 : vector<1x48xf32> to vector<16x48xf32>
    %45 = arith.mulf %43, %44 : vector<16x48xf32>
    %46 = vector.broadcast %25 : vector<1x48xf32> to vector<16x48xf32>
    %47 = arith.addf %45, %46 : vector<16x48xf32>
    %48 = arith.truncf %47 : vector<16x48xf32> to vector<16x48xbf16>
    %c0_34 = arith.constant 0 : index
    %c0_35 = arith.constant 0 : index
    %49 = vector.load %arg14[%c0_34, %c0_35] : memref<16x48xbf16, #tpu.memory_space<vmem>>, vector<16x48xbf16>
    tpu.vector_store %arg14[%c0_34, %c0_35], %48 {strides = array<i32>} : memref<16x48xbf16, #tpu.memory_space<vmem>>, vector<16x48xbf16>,
    return
  }
  func.func @transform_0(%arg0: i32) -> (i32, i32) {
    %c0_i32 = arith.constant 0 : i32
    %c0_i32_0 = arith.constant 0 : i32
    return %arg0, %c0_i32 : i32, i32
  }
  func.func @transform_1(%arg0: i32) -> (i32, i32) {
    %c0_i32 = arith.constant 0 : i32
    %c0_i32_0 = arith.constant 0 : i32
    return %arg0, %c0_i32 : i32, i32
  }
  func.func @transform_2(%arg0: i32) -> (i32, i32) {
    %c0_i32 = arith.constant 0 : i32
    %c0_i32_0 = arith.constant 0 : i32
    return %arg0, %c0_i32 : i32, i32
  }
  func.func @transform_3(%arg0: i32) -> (i32, i32) {
    %c0_i32 = arith.constant 0 : i32
    %c0_i32_0 = arith.constant 0 : i32
    return %arg0, %c0_i32 : i32, i32
  }
  func.func @transform_4(%arg0: i32) -> (i32, i32) {
    %c0_i32 = arith.constant 0 : i32
    %c0_i32_0 = arith.constant 0 : i32
    %c0_i32_1 = arith.constant 0 : i32
    return %c0_i32, %c0_i32_0 : i32, i32
  }
  func.func @transform_5(%arg0: i32) -> (i32, i32) {
    %c0_i32 = arith.constant 0 : i32
    %c0_i32_0 = arith.constant 0 : i32
    %c0_i32_1 = arith.constant 0 : i32
    return %c0_i32, %c0_i32_0 : i32, i32
  }
  func.func @transform_6(%arg0: i32) -> (i32, i32) {
    %c0_i32 = arith.constant 0 : i32
    %c0_i32_0 = arith.constant 0 : i32
    %c0_i32_1 = arith.constant 0 : i32
    return %c0_i32, %c0_i32_0 : i32, i32
  }
  func.func @transform_7(%arg0: i32) -> (i32, i32) {
    %c0_i32 = arith.constant 0 : i32
    %c0_i32_0 = arith.constant 0 : i32
    %c0_i32_1 = arith.constant 0 : i32
    return %c0_i32, %c0_i32_0 : i32, i32
  }
  func.func @transform_8(%arg0: i32) -> (i32, i32) {
    %c0_i32 = arith.constant 0 : i32
    %c0_i32_0 = arith.constant 0 : i32
    %c0_i32_1 = arith.constant 0 : i32
    return %c0_i32, %c0_i32_0 : i32, i32
  }
  func.func @transform_9(%arg0: i32) -> (i32, i32) {
    %c0_i32 = arith.constant 0 : i32
    %c0_i32_0 = arith.constant 0 : i32
    %c0_i32_1 = arith.constant 0 : i32
    return %c0_i32, %c0_i32_0 : i32, i32
  }
  func.func @transform_10(%arg0: i32) -> (i32, i32) {
    %c0_i32 = arith.constant 0 : i32
    %c0_i32_0 = arith.constant 0 : i32
    %c0_i32_1 = arith.constant 0 : i32
    return %c0_i32, %c0_i32_0 : i32, i32
  }
  func.func @transform_11(%arg0: i32) -> (i32, i32) {
    %c0_i32 = arith.constant 0 : i32
    %c0_i32_0 = arith.constant 0 : i32
    %c0_i32_1 = arith.constant 0 : i32
    return %c0_i32, %c0_i32_0 : i32, i32
  }
  func.func @transform_12(%arg0: i32) -> (i32, i32) {
    %c0_i32 = arith.constant 0 : i32
    %c0_i32_0 = arith.constant 0 : i32
    %c0_i32_1 = arith.constant 0 : i32
    return %c0_i32, %c0_i32_0 : i32, i32
  }
  func.func @transform_13(%arg0: i32) -> (i32, i32) {
    %c0_i32 = arith.constant 0 : i32
    %c0_i32_0 = arith.constant 0 : i32
    return %arg0, %c0_i32 : i32, i32
  }
}

module attributes {stable_mosaic.version = 11 : i64} {
  func.func @_proj_kernel(%arg0: i32, %arg1: i32, %arg2: memref<16x48xbf16, #tpu.memory_space<vmem>>, %arg3: memref<48x128xbf16, #tpu.memory_space<vmem>>, %arg4: memref<1x128xf32, #tpu.memory_space<vmem>>, %arg5: memref<16x128xbf16, #tpu.memory_space<vmem>>) attributes {dimension_semantics = [#tpu.dimension_semantics<parallel>, #tpu.dimension_semantics<arbitrary>], iteration_bounds = array<i64: 1, 1>, scalar_prefetch = 0 : i64, scratch_operands = 0 : i64, tpu.core_type = #tpu.core_type<tc>, window_params = [{transform_indices = @transform_0, window_bounds = array<i64: 16, 48>}, {transform_indices = @transform_1, window_bounds = array<i64: 48, 128>}, {transform_indices = @transform_2, window_bounds = array<i64: 1, 128>}, {transform_indices = @transform_3, window_bounds = array<i64: 16, 128>}]} {
    %c0 = arith.constant 0 : index
    %c0_0 = arith.constant 0 : index
    %0 = vector.load %arg2[%c0, %c0_0] : memref<16x48xbf16, #tpu.memory_space<vmem>>, vector<16x48xbf16>
    %c0_1 = arith.constant 0 : index
    %c0_2 = arith.constant 0 : index
    %1 = vector.load %arg3[%c0_1, %c0_2] : memref<48x128xbf16, #tpu.memory_space<vmem>>, vector<48x128xbf16>
    %cst = arith.constant dense<0.000000e+00> : vector<16x128xf32>
    %2 = tpu.matmul %0, %1, %cst {dimension_numbers = #tpu.dot_dimension_numbers<[1], [0], [0], [1], [0, 0, 1, 1], [], []>} : vector<16x48xbf16>, vector<48x128xbf16>, vector<16x128xf32> -> vector<16x128xf32>
    %c0_3 = arith.constant 0 : index
    %c0_4 = arith.constant 0 : index
    %3 = vector.load %arg4[%c0_3, %c0_4] : memref<1x128xf32, #tpu.memory_space<vmem>>, vector<1x128xf32>
    %4 = vector.broadcast %3 : vector<1x128xf32> to vector<16x128xf32>
    %5 = arith.addf %2, %4 : vector<16x128xf32>
    %6 = arith.truncf %5 : vector<16x128xf32> to vector<16x128xbf16>
    %c0_5 = arith.constant 0 : index
    %c0_6 = arith.constant 0 : index
    %7 = vector.load %arg5[%c0_5, %c0_6] : memref<16x128xbf16, #tpu.memory_space<vmem>>, vector<16x128xbf16>
    tpu.vector_store %arg5[%c0_5, %c0_6], %6 {strides = array<i32>} : memref<16x128xbf16, #tpu.memory_space<vmem>>, vector<16x128xbf16>,
    return
  }
  func.func @transform_0(%arg0: i32, %arg1: i32) -> (i32, i32) {
    %c0_i32 = arith.constant 0 : i32
    %c0_i32_0 = arith.constant 0 : i32
    return %arg0, %c0_i32 : i32, i32
  }
  func.func @transform_1(%arg0: i32, %arg1: i32) -> (i32, i32) {
    %c0_i32 = arith.constant 0 : i32
    %c0_i32_0 = arith.constant 0 : i32
    return %c0_i32, %arg1 : i32, i32
  }
  func.func @transform_2(%arg0: i32, %arg1: i32) -> (i32, i32) {
    %c0_i32 = arith.constant 0 : i32
    %c0_i32_0 = arith.constant 0 : i32
    return %c0_i32, %arg1 : i32, i32
  }
  func.func @transform_3(%arg0: i32, %arg1: i32) -> (i32, i32) {
    %c0_i32 = arith.constant 0 : i32
    return %arg0, %arg1 : i32, i32
  }
}

module attributes {stable_mosaic.version = 11 : i64} {
  func.func @_head_transform_kernel(%arg0: i32, %arg1: memref<16x48xbf16, #tpu.memory_space<vmem>>, %arg2: memref<48x48xbf16, #tpu.memory_space<vmem>>, %arg3: memref<1x48xf32, #tpu.memory_space<vmem>>, %arg4: memref<1x48xf32, #tpu.memory_space<vmem>>, %arg5: memref<1x48xf32, #tpu.memory_space<vmem>>, %arg6: memref<16x48xbf16, #tpu.memory_space<vmem>>) attributes {dimension_semantics = [#tpu.dimension_semantics<parallel>], iteration_bounds = array<i64: 1>, scalar_prefetch = 0 : i64, scratch_operands = 0 : i64, tpu.core_type = #tpu.core_type<tc>, window_params = [{transform_indices = @transform_0, window_bounds = array<i64: 16, 48>}, {pipeline_mode = #tpu.pipeline_mode<synchronous>, transform_indices = @transform_1, window_bounds = array<i64: 48, 48>}, {pipeline_mode = #tpu.pipeline_mode<synchronous>, transform_indices = @transform_2, window_bounds = array<i64: 1, 48>}, {pipeline_mode = #tpu.pipeline_mode<synchronous>, transform_indices = @transform_3, window_bounds = array<i64: 1, 48>}, {pipeline_mode = #tpu.pipeline_mode<synchronous>, transform_indices = @transform_4, window_bounds = array<i64: 1, 48>}, {transform_indices = @transform_5, window_bounds = array<i64: 16, 48>}]} {
    %c0 = arith.constant 0 : index
    %c0_0 = arith.constant 0 : index
    %0 = vector.load %arg1[%c0, %c0_0] : memref<16x48xbf16, #tpu.memory_space<vmem>>, vector<16x48xbf16>
    %c0_1 = arith.constant 0 : index
    %c0_2 = arith.constant 0 : index
    %1 = vector.load %arg2[%c0_1, %c0_2] : memref<48x48xbf16, #tpu.memory_space<vmem>>, vector<48x48xbf16>
    %cst = arith.constant dense<0.000000e+00> : vector<16x48xf32>
    %2 = tpu.matmul %0, %1, %cst {dimension_numbers = #tpu.dot_dimension_numbers<[1], [0], [0], [1], [0, 0, 1, 1], [], []>} : vector<16x48xbf16>, vector<48x48xbf16>, vector<16x48xf32> -> vector<16x48xf32>
    %c0_3 = arith.constant 0 : index
    %c0_4 = arith.constant 0 : index
    %3 = vector.load %arg3[%c0_3, %c0_4] : memref<1x48xf32, #tpu.memory_space<vmem>>, vector<1x48xf32>
    %4 = vector.broadcast %3 : vector<1x48xf32> to vector<16x48xf32>
    %5 = arith.addf %2, %4 : vector<16x48xf32>
    %6 = arith.mulf %5, %5 : vector<16x48xf32>
    %7 = arith.mulf %5, %6 : vector<16x48xf32>
    %cst_5 = arith.constant 4.471500e-02 : f32
    %8 = vector.broadcast %cst_5 : f32 to vector<16x48xf32>
    %9 = arith.mulf %8, %7 : vector<16x48xf32>
    %10 = arith.addf %5, %9 : vector<16x48xf32>
    %cst_6 = arith.constant 0.797884583 : f32
    %11 = vector.broadcast %cst_6 : f32 to vector<16x48xf32>
    %12 = arith.mulf %11, %10 : vector<16x48xf32>
    %13 = math.tanh %12 : vector<16x48xf32>
    %cst_7 = arith.constant 1.000000e+00 : f32
    %14 = vector.broadcast %cst_7 : f32 to vector<16x48xf32>
    %15 = arith.addf %14, %13 : vector<16x48xf32>
    %cst_8 = arith.constant 5.000000e-01 : f32
    %16 = vector.broadcast %cst_8 : f32 to vector<16x48xf32>
    %17 = arith.mulf %16, %15 : vector<16x48xf32>
    %18 = arith.mulf %5, %17 : vector<16x48xf32>
    %c0_9 = arith.constant 0 : index
    %c0_10 = arith.constant 0 : index
    %19 = vector.load %arg4[%c0_9, %c0_10] : memref<1x48xf32, #tpu.memory_space<vmem>>, vector<1x48xf32>
    %c0_11 = arith.constant 0 : index
    %c0_12 = arith.constant 0 : index
    %20 = vector.load %arg5[%c0_11, %c0_12] : memref<1x48xf32, #tpu.memory_space<vmem>>, vector<1x48xf32>
    %cst_13 = arith.constant dense<0.000000e+00> : vector<16xf32>
    %21 = vector.multi_reduction <add>, %18, %cst_13 [1] : vector<16x48xf32> to vector<16xf32>
    %22 = vector.shape_cast %21 : vector<16xf32> to vector<16x1xf32>
    %cst_14 = arith.constant 4.800000e+01 : f32
    %23 = vector.broadcast %cst_14 : f32 to vector<16x1xf32>
    %24 = arith.divf %22, %23 : vector<16x1xf32>
    %25 = vector.broadcast %24 : vector<16x1xf32> to vector<16x48xf32>
    %26 = arith.subf %18, %25 : vector<16x48xf32>
    %27 = arith.mulf %26, %26 : vector<16x48xf32>
    %cst_15 = arith.constant dense<0.000000e+00> : vector<16xf32>
    %28 = vector.multi_reduction <add>, %27, %cst_15 [1] : vector<16x48xf32> to vector<16xf32>
    %29 = vector.shape_cast %28 : vector<16xf32> to vector<16x1xf32>
    %cst_16 = arith.constant 4.800000e+01 : f32
    %30 = vector.broadcast %cst_16 : f32 to vector<16x1xf32>
    %31 = arith.divf %29, %30 : vector<16x1xf32>
    %32 = vector.broadcast %24 : vector<16x1xf32> to vector<16x48xf32>
    %33 = arith.subf %18, %32 : vector<16x48xf32>
    %cst_17 = arith.constant 9.99999996E-13 : f32
    %34 = vector.broadcast %cst_17 : f32 to vector<16x1xf32>
    %35 = arith.addf %31, %34 : vector<16x1xf32>
    %36 = math.rsqrt %35 : vector<16x1xf32>
    %37 = vector.broadcast %36 : vector<16x1xf32> to vector<16x48xf32>
    %38 = arith.mulf %33, %37 : vector<16x48xf32>
    %39 = vector.broadcast %19 : vector<1x48xf32> to vector<16x48xf32>
    %40 = arith.mulf %38, %39 : vector<16x48xf32>
    %41 = vector.broadcast %20 : vector<1x48xf32> to vector<16x48xf32>
    %42 = arith.addf %40, %41 : vector<16x48xf32>
    %43 = arith.truncf %42 : vector<16x48xf32> to vector<16x48xbf16>
    %c0_18 = arith.constant 0 : index
    %c0_19 = arith.constant 0 : index
    %44 = vector.load %arg6[%c0_18, %c0_19] : memref<16x48xbf16, #tpu.memory_space<vmem>>, vector<16x48xbf16>
    tpu.vector_store %arg6[%c0_18, %c0_19], %43 {strides = array<i32>} : memref<16x48xbf16, #tpu.memory_space<vmem>>, vector<16x48xbf16>,
    return
  }
  func.func @transform_0(%arg0: i32) -> (i32, i32) {
    %c0_i32 = arith.constant 0 : i32
    %c0_i32_0 = arith.constant 0 : i32
    return %arg0, %c0_i32 : i32, i32
  }
  func.func @transform_1(%arg0: i32) -> (i32, i32) {
    %c0_i32 = arith.constant 0 : i32
    %c0_i32_0 = arith.constant 0 : i32
    %c0_i32_1 = arith.constant 0 : i32
    return %c0_i32, %c0_i32_0 : i32, i32
  }
  func.func @transform_2(%arg0: i32) -> (i32, i32) {
    %c0_i32 = arith.constant 0 : i32
    %c0_i32_0 = arith.constant 0 : i32
    %c0_i32_1 = arith.constant 0 : i32
    return %c0_i32, %c0_i32_0 : i32, i32
  }
  func.func @transform_3(%arg0: i32) -> (i32, i32) {
    %c0_i32 = arith.constant 0 : i32
    %c0_i32_0 = arith.constant 0 : i32
    %c0_i32_1 = arith.constant 0 : i32
    return %c0_i32, %c0_i32_0 : i32, i32
  }
  func.func @transform_4(%arg0: i32) -> (i32, i32) {
    %c0_i32 = arith.constant 0 : i32
    %c0_i32_0 = arith.constant 0 : i32
    %c0_i32_1 = arith.constant 0 : i32
    return %c0_i32, %c0_i32_0 : i32, i32
  }
  func.func @transform_5(%arg0: i32) -> (i32, i32) {
    %c0_i32 = arith.constant 0 : i32
    %c0_i32_0 = arith.constant 0 : i32
    return %arg0, %c0_i32 : i32, i32
  }
}

</mosaic_0001>

<llo_original>
// kernel: hanzi_forward.9
$region0: #{hanzi_forward.9}
  #allocation0 [shape = 'u32[]', space=smem, size = 0x4, offset = 0x4, fixed_abs, tag = 'smem constant byte address 0x4 - core index']
  #allocation1 [shape = 'u32[144,128]{1,0:T(1,128)}', space=vmem, size = 0x12000, scoped, tag = 'internal scratch']
  %s0 = inlined_call_operand.vmem [shape: bf16[16,48], index: 0, kind: input, shape index: {}]
  %s1 = inlined_call_operand.vmem [shape: bf16[16,48], index: 1, kind: input, shape index: {}]
  %s2 = inlined_call_operand.vmem [shape: bf16[48,48], index: 2, kind: input, shape index: {}]
  %s3 = inlined_call_operand.vmem [shape: f32[1,48], index: 3, kind: input, shape index: {}]
  %s4 = inlined_call_operand.vmem [shape: f32[1,48], index: 4, kind: input, shape index: {}]
  %s5 = inlined_call_operand.vmem [shape: f32[1,48], index: 5, kind: input, shape index: {}]
  %s6 = inlined_call_operand.vmem [shape: bf16[16,48], index: 6, kind: output, shape index: {}]
  %s7 = sld [smem:[#allocation0]]
  $region34: #{hanzi_forward.9} parent=0
    _
  %s9 = ssub.s32 1, %s7
  %s10 = scalar_select 0, %s9, %s7
  // Predicated region
  $region2: #{hanzi_forward.9} parent=0 // pred_check
    _
  $region3: #{hanzi_forward.9} parent=0 // pred_check_branch
    %12 = sbr.rel (0) target = $region5
  $region4: #{hanzi_forward.9} parent=0 // pred_region
    _
  $region5: #{hanzi_forward.9} parent=0 // pred_fallthru
    _
  // Predicated region
  $region6: #{hanzi_forward.9} parent=0 // pred_check
    _
  $region7: #{hanzi_forward.9} parent=0 // pred_check_branch
    %14 = sbr.rel (0) target = $region9
  $region8: #{hanzi_forward.9} parent=0 // pred_region
    _
  $region9: #{hanzi_forward.9} parent=0 // pred_fallthru
    _
  // Predicated region
  $region10: #{hanzi_forward.9} parent=0 // pred_check
    _
  $region11: #{hanzi_forward.9} parent=0 // pred_check_branch
    %16 = sbr.rel (0) target = $region13
  $region12: #{hanzi_forward.9} parent=0 // pred_region
    _
  $region13: #{hanzi_forward.9} parent=0 // pred_fallthru
    _
  // Predicated region
  $region14: #{hanzi_forward.9} parent=0 // pred_check
    _
  $region15: #{hanzi_forward.9} parent=0 // pred_check_branch
    %18 = sbr.rel (0) target = $region17
  $region16: #{hanzi_forward.9} parent=0 // pred_region
    _
  $region17: #{hanzi_forward.9} parent=0 // pred_fallthru
    _
  // Predicated region
  $region18: #{hanzi_forward.9} parent=0 // pred_check
    _
  $region19: #{hanzi_forward.9} parent=0 // pred_check_branch
    %20 = sbr.rel (0) target = $region21
  $region20: #{hanzi_forward.9} parent=0 // pred_region
    _
  $region21: #{hanzi_forward.9} parent=0 // pred_fallthru
    _
  // Predicated region
  $region22: #{hanzi_forward.9} parent=0 // pred_check
    _
  $region23: #{hanzi_forward.9} parent=0 // pred_check_branch
    %22 = sbr.rel (0) target = $region25
  $region24: #{hanzi_forward.9} parent=0 // pred_region
    _
  $region25: #{hanzi_forward.9} parent=0 // pred_fallthru
    _
  %v24 = vld [vmem:[%s0] sm:$0xf]
  %v25 = vld [vmem:[%s0 + $0x4] sm:$0xf]
  %v26 = vld [vmem:[%s2] sm:$0xf]
  %v27 = vld [vmem:[%s2 + $0x4] sm:$0xf]
  %v28 = vld [vmem:[%s2 + $0x8] sm:$0xf]
  %v29 = vld [vmem:[%s2 + $0xc] sm:$0xf]
  %v30 = vld [vmem:[%s2 + $0x10] sm:$0xf]
  %v31 = vld [vmem:[%s2 + $0x14] sm:$0xf]
  %v32 = vld [vmem:[%s3] sm:$0x1]
  %v34 = vlaneseq
  %v35 = vshrl.u32 %v34, 7
  %v36 = vsub.s32 0, %v35
  %v37 = vrot.slane %v32, %v36
  %v41 = vunpack.c.l.b16 %v24
  %v42 = vunpack.c.l.b16 %v25
  %v43 = vpack.c.b16 %v42, %v41
  %v50 = vunpack.c.l.b16 %v26
  %v51 = vunpack.c.l.b16 %v27
  %v52 = vunpack.c.l.b16 %v28
  %v53 = vunpack.c.l.b16 %v29
  %v54 = vunpack.c.l.b16 %v30
  %v55 = vunpack.c.l.b16 %v31
  %v56 = vpack.c.b16 %v51, %v50
  %v57 = vpack.c.b16 %v53, %v52
  %v58 = vpack.c.b16 %v55, %v54
  %vm62 = vcmask 392192
  %v64 = vsel %vm62, %v43, 0
  %66 = vmatprep.subr.bf16.mxu0 0
  %67 = vmatpush1.bf16.msra.mxu0 %v56
  %68 = vmatprep.subr.bf16.mxu0 0
  %69 = vmatpush1.bf16.msra.mxu0 %v57
  %70 = vmatprep.subr.bf16.mxu0 0
  %71 = vmatpush1.bf16.msra.mxu0 %v58
  %72 = vmatprep.subr.bf16.mxu0 0
  %73 = vmatpush1.bf16.msra.mxu0 0
  %74 = vmatprep.subr.bf16.mxu0 0
  %75 = vmatpush1.bf16.msra.mxu0 0
  %76 = vmatprep.subr.bf16.mxu0 0
  %77 = vmatpush1.bf16.msra.mxu0 0
  %78 = vmatprep.subr.bf16.mxu0 0
  %79 = vmatpush1.bf16.msra.mxu0 0
  %80 = vmatprep.subr.bf16.mxu0 0
  %81 = vmatpush1.bf16.msra.mxu0 0
  %82 = vmatprep.subr.bf16.mxu0 0
  %83 = vmatpush1.bf16.msra.mxu0 0
  %84 = vmatprep.subr.bf16.mxu0 0
  %85 = vmatpush1.bf16.msra.mxu0 0
  %86 = vmatprep.subr.bf16.mxu0 0
  %87 = vmatpush1.bf16.msra.mxu0 0
  %88 = vmatprep.subr.bf16.mxu0 0
  %89 = vmatpush1.bf16.msra.mxu0 0
  %90 = vmatprep.subr.bf16.mxu0 0
  %91 = vmatpush1.bf16.msra.mxu0 0
  %92 = vmatprep.subr.bf16.mxu0 0
  %93 = vmatpush1.bf16.msra.mxu0 0
  %94 = vmatprep.subr.bf16.mxu0 0
  %95 = vmatpush1.bf16.msra.mxu0 0
  %96 = vmatprep.subr.bf16.mxu0 0
  %97 = vmatpush1.bf16.msra.mxu0 0
  %98 = vmatprep.mubr.bf16.mxu0 0
  %99 = vmatmul.mubr.bf16.gmra.mrb[0].mxu0 %v64
  %v100 = vpop.f32.mrb[0].mxu0
  %v101 = vadd.f32 %v37, %v100
  %v102 = vpop.f32.mrb[0].mxu0
  %v103 = vpop.f32.mrb[0].mxu0
  %v104 = vadd.f32 %v37, %v103
  %v105 = vpop.f32.mrb[0].mxu0
  %106 = vdwg.mxu0
  %v107 = vld [vmem:[%s1] sm:$0xf]
  %v108 = vld [vmem:[%s1 + $0x4] sm:$0xf]
  %v109 = vunpack.c.l.bf16 %v107
  %v110 = vunpack.c.l.bf16 %v108
  %v111 = vadd.f32 %v101, %v109
  %v112 = vadd.f32 %v104, %v110
  %v113 = vld [vmem:[%s4] sm:$0x1]
  %v114 = vld [vmem:[%s5] sm:$0x1]
  %v115 = vsel %vm62, %v111, 0.0
  %116 = vadd.xlane.f32.xlu0 %v115
  %v117 = vpop.xlane.xlu0 %116
  %v118 = vsel %vm62, %v112, 0.0
  %119 = vadd.xlane.f32.xlu0 %v118
  %v120 = vpop.xlane.xlu0 %119
  %v121 = vrcp.pop 48.0
  %v122 = vmul.f32 %v117, %v121
  %v123 = vmul.f32 %v120, %v121
  %v124 = vsub.f32 %v111, %v122
  %v125 = vsub.f32 %v112, %v123
  %v126 = vmul.f32 %v124, %v124
  %v127 = vmul.f32 %v125, %v125
  %v128 = vsel %vm62, %v126, 0.0
  %129 = vadd.xlane.f32.xlu0 %v128
  %v130 = vpop.xlane.xlu0 %129
  %v131 = vsel %vm62, %v127, 0.0
  %132 = vadd.xlane.f32.xlu0 %v131
  %v133 = vpop.xlane.xlu0 %132
  %v134 = vmul.f32 %v130, %v121
  %v135 = vmul.f32 %v133, %v121
  %v136 = vadd.f32 %v134, 1e-12
  %v137 = vadd.f32 %v135, 1e-12
  %v138 = vrsqrt.pop %v136
  %v139 = vrsqrt.pop %v137
  %v140 = vmul.f32 %v124, %v138
  %v141 = vmul.f32 %v125, %v139
  %v143 = vlaneseq
  %v144 = vshrl.u32 %v143, 7
  %v145 = vsub.s32 0, %v144
  %v146 = vrot.slane %v113, %v145
  %v148 = vmul.f32 %v140, %v146
  %v149 = vmul.f32 %v141, %v146
  %v151 = vlaneseq
  %v152 = vshrl.u32 %v151, 7
  %v153 = vsub.s32 0, %v152
  %v154 = vrot.slane %v114, %v153
  %v156 = vadd.f32 %v148, %v154
  %v157 = vadd.f32 %v149, %v154
  %v158 = vpack.c.bf16 %v157, %v156
  %v160 = vunpack.c.l.b16 %v158
  %v161 = vunpack.c.h.b16 %v158
  %v162 = vpack.c.b16 %v160, %v160
  %v163 = vpack.c.b16 %v161, %v161
  %vm166 = vcmask 388096
  %167 = vst.msk [vmem:[%s6] sm:$0xf] %vm166, %v162
  %168 = vst.msk [vmem:[%s6 + $0x4] sm:$0xf] %vm166, %v163
  // Predicated region
  $region26: #{hanzi_forward.9} parent=0 // pred_check
    _
  $region27: #{hanzi_forward.9} parent=0 // pred_check_branch
    %170 = sbr.rel (0) target = $region29
  $region28: #{hanzi_forward.9} parent=0 // pred_region
    _
  $region29: #{hanzi_forward.9} parent=0 // pred_fallthru
    _
  // Predicated region
  $region30: #{hanzi_forward.9} parent=0 // pred_check
    _
  $region31: #{hanzi_forward.9} parent=0 // pred_check_branch
    %172 = sbr.rel (0) target = $region33
  $region32: #{hanzi_forward.9} parent=0 // pred_region
    _
  $region33: #{hanzi_forward.9} parent=0 // pred_fallthru
    _

// kernel: hanzi_forward.8
$region0: #{hanzi_forward.8}
  #allocation0 [shape = 'u32[]', space=smem, size = 0x4, offset = 0x4, fixed_abs, tag = 'smem constant byte address 0x4 - core index']
  #allocation1 [shape = 'u32[144,128]{1,0:T(1,128)}', space=vmem, size = 0x12000, scoped, tag = 'internal scratch']
  %s0 = inlined_call_operand.vmem [shape: bf16[2,8,48], index: 0, kind: input, shape index: {}]
  %s1 = inlined_call_operand.vmem [shape: f32[1,48], index: 1, kind: input, shape index: {}]
  %s2 = inlined_call_operand.vmem [shape: f32[1,48], index: 2, kind: input, shape index: {}]
  %s3 = inlined_call_operand.vmem [shape: bf16[48,144], index: 3, kind: input, shape index: {}]
  %s4 = inlined_call_operand.vmem [shape: f32[1,144], index: 4, kind: input, shape index: {}]
  %s5 = inlined_call_operand.vmem [shape: f32[2,1,8], index: 5, kind: input, shape index: {}]
  %s6 = inlined_call_operand.vmem [shape: bf16[2,8,48], index: 6, kind: output, shape index: {0}]
  %s7 = inlined_call_operand.vmem [shape: bf16[2,8,48], index: 7, kind: output, shape index: {1}]
  %8 = xla_tuple %s6, %s7
  %s9 = sld [smem:[#allocation0]]
  $region65: #{hanzi_forward.8} parent=0
    _
  %s11 = ssub.s32 1, %s9
  %s12 = scalar_select 0, %s11, %s9
  loop: start=0, step=1, limit=4
  $region2: #{hanzi_forward.8} parent=0 // loop_pre_header
    _
  $region3: #{hanzi_forward.8} parent=0 // loop_header
    %s14 = sphi 0, %s18
    %p15 = scmp.ge.s32.totalorder %s14, 4
    %s24 = sphi 0, %s26
    %s27 = sphi 0, %s24
    %s28 = sphi 0, %s27
    %s44 = sphi 0, %s28
    %s48 = sphi 0, %s48
    %s50 = sphi 0, %s48
    %s51 = sphi 0, %s50
    %s65 = sphi 0, %s51
    %s69 = sphi 0, %s69
    %s71 = sphi 0, %s69
    %s72 = sphi 0, %s71
    %s86 = sphi 0, %s72
    %s90 = sphi 0, %s90
    %s92 = sphi 0, %s90
    %s93 = sphi 0, %s92
    %s107 = sphi 0, %s93
    %s111 = sphi 0, %s111
    %s113 = sphi 0, %s111
    %s114 = sphi 0, %s113
    %s128 = sphi 0, %s114
    %s134 = sphi 0, %s136
    %s137 = sphi 0, %s134
    %s138 = sphi 0, %s137
    %s154 = sphi 0, %s138
    %s160 = sphi 0, %s162
    %s163 = sphi 0, %s160
    %s164 = sphi 0, %s163
    %s180 = sphi 0, %s164
    %s186 = sphi 0, %s188
    %s189 = sphi 0, %s186
    %s190 = sphi 0, %s189
    %s206 = sphi 0, %s190
  $region4: #{hanzi_forward.8} parent=0 // loop_header_branch
    %17 = sbr.rel (%p15) target = $region8
  $region5: #{hanzi_forward.8} parent=0 // loop_body
    %s19 = ssub.s32 %s14, 1
    %s20 = ssub.s32 %s14, 2
    %s21 = sadd.s32 %s14, 1
    %s22 = ssub.s32 %s14, %s21
    %p23 = scmp.eq.s32.totalorder %s22, 0
    %s25 = sadd.s32 %s24, 1
    %s26 = scalar_select %p23, %s24, %s25
    %p29 = pneg %p23
    %p30 = scmp.eq.s32.totalorder %s14, 1
    %p31 = por %p29, %p30
    %p32 = scmp.ne.s32.totalorder %s24, %s27
    %p33 = scmp.eq.s32.totalorder %s14, 0
    %p34 = por %p32, %p33
    %p35 = scmp.ne.s32.totalorder %s24, %s27
    %p36 = scmp.eq.s32.totalorder %s19, 1
    %p37 = por %p35, %p36
    %p38 = scmp.ne.s32.totalorder %s27, %s28
    %p39 = scmp.eq.s32.totalorder %s19, 0
    %p40 = por %p38, %p39
    %p41 = scmp.ne.s32.totalorder %s27, %s28
    %p42 = scmp.eq.s32.totalorder %s20, 1
    %p43 = por %p41, %p42
    %p45 = scmp.ne.s32.totalorder %s28, %s44
    %p46 = scmp.eq.s32.totalorder %s20, 0
    %p47 = por %p45, %p46
    %s49 = sadd.s32 %s48, 1
    %p52 = scmp.eq.s32.totalorder %s14, 1
    %p53 = scmp.ne.s32.totalorder %s48, %s50
    %p54 = scmp.eq.s32.totalorder %s14, 0
    %p55 = por %p53, %p54
    %p56 = scmp.ne.s32.totalorder %s48, %s50
    %p57 = scmp.eq.s32.totalorder %s19, 1
    %p58 = por %p56, %p57
    %p59 = scmp.ne.s32.totalorder %s50, %s51
    %p60 = scmp.eq.s32.totalorder %s19, 0
    %p61 = por %p59, %p60
    %p62 = scmp.ne.s32.totalorder %s50, %s51
    %p63 = scmp.eq.s32.totalorder %s20, 1
    %p64 = por %p62, %p63
    %p66 = scmp.ne.s32.totalorder %s51, %s65
    %p67 = scmp.eq.s32.totalorder %s20, 0
    %p68 = por %p66, %p67
    %s70 = sadd.s32 %s69, 1
    %p73 = scmp.eq.s32.totalorder %s14, 1
    %p74 = scmp.ne.s32.totalorder %s69, %s71
    %p75 = scmp.eq.s32.totalorder %s14, 0
    %p76 = por %p74, %p75
    %p77 = scmp.ne.s32.totalorder %s69, %s71
    %p78 = scmp.eq.s32.totalorder %s19, 1
    %p79 = por %p77, %p78
    %p80 = scmp.ne.s32.totalorder %s71, %s72
    %p81 = scmp.eq.s32.totalorder %s19, 0
    %p82 = por %p80, %p81
    %p83 = scmp.ne.s32.totalorder %s71, %s72
    %p84 = scmp.eq.s32.totalorder %s20, 1
    %p85 = por %p83, %p84
    %p87 = scmp.ne.s32.totalorder %s72, %s86
    %p88 = scmp.eq.s32.totalorder %s20, 0
    %p89 = por %p87, %p88
    %s91 = sadd.s32 %s90, 1
    %p94 = scmp.eq.s32.totalorder %s14, 1
    %p95 = scmp.ne.s32.totalorder %s90, %s92
    %p96 = scmp.eq.s32.totalorder %s14, 0
    %p97 = por %p95, %p96
    %p98 = scmp.ne.s32.totalorder %s90, %s92
    %p99 = scmp.eq.s32.totalorder %s19, 1
    %p100 = por %p98, %p99
    %p101 = scmp.ne.s32.totalorder %s92, %s93
    %p102 = scmp.eq.s32.totalorder %s19, 0
    %p103 = por %p101, %p102
    %p104 = scmp.ne.s32.totalorder %s92, %s93
    %p105 = scmp.eq.s32.totalorder %s20, 1
    %p106 = por %p104, %p105
    %p108 = scmp.ne.s32.totalorder %s93, %s107
    %p109 = scmp.eq.s32.totalorder %s20, 0
    %p110 = por %p108, %p109
    %s112 = sadd.s32 %s111, 1
    %p115 = scmp.eq.s32.totalorder %s14, 1
    %p116 = scmp.ne.s32.totalorder %s111, %s113
    %p117 = scmp.eq.s32.totalorder %s14, 0
    %p118 = por %p116, %p117
    %p119 = scmp.ne.s32.totalorder %s111, %s113
    %p120 = scmp.eq.s32.totalorder %s19, 1
    %p121 = por %p119, %p120
    %p122 = scmp.ne.s32.totalorder %s113, %s114
    %p123 = scmp.eq.s32.totalorder %s19, 0
    %p124 = por %p122, %p123
    %p125 = scmp.ne.s32.totalorder %s113, %s114
    %p126 = scmp.eq.s32.totalorder %s20, 1
    %p127 = por %p125, %p126
    %p129 = scmp.ne.s32.totalorder %s114, %s128
    %p130 = scmp.eq.s32.totalorder %s20, 0
    %p131 = por %p129, %p130
    %s132 = ssub.s32 %s14, %s21
    %p133 = scmp.eq.s32.totalorder %s132, 0
    %s135 = sadd.s32 %s134, 1
    %s136 = scalar_select %p133, %s134, %s135
    %p139 = pneg %p133
    %p140 = scmp.eq.s32.totalorder %s14, 1
    %p141 = por %p139, %p140
    %p142 = scmp.ne.s32.totalorder %s134, %s137
    %p143 = scmp.eq.s32.totalorder %s14, 0
    %p144 = por %p142, %p143
    %p145 = scmp.ne.s32.totalorder %s134, %s137
    %p146 = scmp.eq.s32.totalorder %s19, 1
    %p147 = por %p145, %p146
    %p148 = scmp.ne.s32.totalorder %s137, %s138
    %p149 = scmp.eq.s32.totalorder %s19, 0
    %p150 = por %p148, %p149
    %p151 = scmp.ne.s32.totalorder %s137, %s138
    %p152 = scmp.eq.s32.totalorder %s20, 1
    %p153 = por %p151, %p152
    %p155 = scmp.ne.s32.totalorder %s138, %s154
    %p156 = scmp.eq.s32.totalorder %s20, 0
    %p157 = por %p155, %p156
    %s158 = ssub.s32 %s14, %s21
    %p159 = scmp.eq.s32.totalorder %s158, 0
    %s161 = sadd.s32 %s160, 1
    %s162 = scalar_select %p159, %s160, %s161
    %p165 = pneg %p159
    %p166 = scmp.eq.s32.totalorder %s14, 1
    %p167 = por %p165, %p166
    %p168 = scmp.ne.s32.totalorder %s160, %s163
    %p169 = scmp.eq.s32.totalorder %s14, 0
    %p170 = por %p168, %p169
    %p171 = scmp.ne.s32.totalorder %s160, %s163
    %p172 = scmp.eq.s32.totalorder %s19, 1
    %p173 = por %p171, %p172
    %p174 = scmp.ne.s32.totalorder %s163, %s164
    %p175 = scmp.eq.s32.totalorder %s19, 0
    %p176 = por %p174, %p175
    %p177 = scmp.ne.s32.totalorder %s163, %s164
    %p178 = scmp.eq.s32.totalorder %s20, 1
    %p179 = por %p177, %p178
    %p181 = scmp.ne.s32.totalorder %s164, %s180
    %p182 = scmp.eq.s32.totalorder %s20, 0
    %p183 = por %p181, %p182
    %s184 = ssub.s32 %s14, %s21
    %p185 = scmp.eq.s32.totalorder %s184, 0
    %s187 = sadd.s32 %s186, 1
    %s188 = scalar_select %p185, %s186, %s187
    %p191 = pneg %p185
    %p192 = scmp.eq.s32.totalorder %s14, 1
    %p193 = por %p191, %p192
    %p194 = scmp.ne.s32.totalorder %s186, %s189
    %p195 = scmp.eq.s32.totalorder %s14, 0
    %p196 = por %p194, %p195
    %p197 = scmp.ne.s32.totalorder %s186, %s189
    %p198 = scmp.eq.s32.totalorder %s19, 1
    %p199 = por %p197, %p198
    %p200 = scmp.ne.s32.totalorder %s189, %s190
    %p201 = scmp.eq.s32.totalorder %s19, 0
    %p202 = por %p200, %p201
    %p203 = scmp.ne.s32.totalorder %s189, %s190
    %p204 = scmp.eq.s32.totalorder %s20, 1
    %p205 = por %p203, %p204
    %p207 = scmp.ne.s32.totalorder %s190, %s206
    %p208 = scmp.eq.s32.totalorder %s20, 0
    %p209 = por %p207, %p208
    %p210 = scmp.le.s32.totalorder 1, %s14
    %p211 = scmp.lt.s32.totalorder %s14, 3
    %p212 = pnand %p210, %p211
    %p213 = pneg %p212
    // Predicated region
    $region9: #{hanzi_forward.8} parent=5 // pred_check
      _
    $region10: #{hanzi_forward.8} parent=5 // pred_check_branch
      %215 = sbr.rel (%p212) target = $region12
    $region11: #{hanzi_forward.8} parent=5 // pred_region
      %s216 = ssub.s32 %s14, 1
      // Predicated region
      $region13: #{hanzi_forward.8} parent=11 // pred_check
        %p217 = pneg %p61
      $region14: #{hanzi_forward.8} parent=11 // pred_check_branch
        %219 = sbr.rel (%p217) target = $region16
      $region15: #{hanzi_forward.8} parent=11 // pred_region
        _
      $region16: #{hanzi_forward.8} parent=11 // pred_fallthru
        _
      // Predicated region
      $region17: #{hanzi_forward.8} parent=11 // pred_check
        %p220 = pneg %p82
      $region18: #{hanzi_forward.8} parent=11 // pred_check_branch
        %222 = sbr.rel (%p220) target = $region20
      $region19: #{hanzi_forward.8} parent=11 // pred_region
        _
      $region20: #{hanzi_forward.8} parent=11 // pred_fallthru
        _
      // Predicated region
      $region21: #{hanzi_forward.8} parent=11 // pred_check
        %p223 = pneg %p103
      $region22: #{hanzi_forward.8} parent=11 // pred_check_branch
        %225 = sbr.rel (%p223) target = $region24
      $region23: #{hanzi_forward.8} parent=11 // pred_region
        _
      $region24: #{hanzi_forward.8} parent=11 // pred_fallthru
        _
      // Predicated region
      $region25: #{hanzi_forward.8} parent=11 // pred_check
        %p226 = pneg %p124
      $region26: #{hanzi_forward.8} parent=11 // pred_check_branch
        %228 = sbr.rel (%p226) target = $region28
      $region27: #{hanzi_forward.8} parent=11 // pred_region
        _
      $region28: #{hanzi_forward.8} parent=11 // pred_fallthru
        _
    $region12: #{hanzi_forward.8} parent=5 // pred_fallthru
      _
    %p229 = scmp.lt.s32.totalorder %s14, 2
    // Predicated region
    $region29: #{hanzi_forward.8} parent=5 // pred_check
      %p230 = pneg %p229
    $region30: #{hanzi_forward.8} parent=5 // pred_check_branch
      %232 = sbr.rel (%p230) target = $region32
    $region31: #{hanzi_forward.8} parent=5 // pred_region
      // Predicated region
      $region33: #{hanzi_forward.8} parent=31 // pred_check
        %p233 = pneg %p34
      $region34: #{hanzi_forward.8} parent=31 // pred_check_branch
        %235 = sbr.rel (%p233) target = $region36
      $region35: #{hanzi_forward.8} parent=31 // pred_region
        %p236 = scmp.lt.s32.totalorder %s14, 1
        %s237 = scalar_select %p236, %s14, 1
        %s238 = smul.addr %s237, 4
        %s239 = scalar_lea.vmem %s0, %s238
      $region36: #{hanzi_forward.8} parent=31 // pred_fallthru
        _
      // Predicated region
      $region37: #{hanzi_forward.8} parent=31 // pred_check
        %p240 = pneg %p144
      $region38: #{hanzi_forward.8} parent=31 // pred_check_branch
        %242 = sbr.rel (%p240) target = $region40
      $region39: #{hanzi_forward.8} parent=31 // pred_region
        %p243 = scmp.lt.s32.totalorder %s14, 1
        %s244 = scalar_select %p243, %s14, 1
        %s245 = scalar_lea.vmem %s5, %s244
      $region40: #{hanzi_forward.8} parent=31 // pred_fallthru
        _
    $region32: #{hanzi_forward.8} parent=5 // pred_fallthru
      _
    %p246 = scmp.le.s32.totalorder 1, %s14
    %p247 = scmp.lt.s32.totalorder %s14, 3
    %p248 = pnand %p246, %p247
    %p249 = pneg %p248
    // Predicated region
    $region41: #{hanzi_forward.8} parent=5 // pred_check
      _
    $region42: #{hanzi_forward.8} parent=5 // pred_check_branch
      %251 = sbr.rel (%p248) target = $region44
    $region43: #{hanzi_forward.8} parent=5 // pred_region
      %s252 = ssub.s32 %s14, 1
      %p253 = scmp.lt.s32.totalorder %s19, 1
      %s254 = scalar_select %p253, %s19, 1
      %s255 = smul.addr %s254, 4
      %s256 = scalar_lea.vmem %s0, %s255
      %p257 = pneg %p40
      %p258 = pneg %p37
      %p259 = pneg %p61
      %p260 = pneg %p58
      %p261 = pneg %p82
      %p262 = pneg %p79
      %p263 = pneg %p103
      %p264 = pneg %p100
      %p265 = pneg %p124
      %p266 = pneg %p121
      %p267 = scmp.lt.s32.totalorder %s19, 1
      %s268 = scalar_select %p267, %s19, 1
      %s269 = scalar_lea.vmem %s5, %s268
      %p270 = pneg %p150
      %p271 = pneg %p147
      %p272 = pneg %p176
      %p273 = pneg %p173
      %p274 = scmp.lt.s32.totalorder %s19, 1
      %s275 = scalar_select %p274, %s19, 1
      %s276 = smul.addr %s275, 4
      %s277 = scalar_lea.vmem %s6, %s276
      %p278 = pneg %p202
      %p279 = pneg %p199
      %p280 = scmp.lt.s32.totalorder %s19, 1
      %s281 = scalar_select %p280, %s19, 1
      %s282 = smul.addr %s281, 4
      %s283 = scalar_lea.vmem %s7, %s282
      %p284 = scmp.lt.s32.totalorder %s19, 1
      %s285 = scalar_select %p284, %s19, 1
      %s286 = smul.addr %s285, 4
      %s287 = scalar_lea.vmem %s0, %s286
      %p288 = scmp.lt.s32.totalorder %s19, 1
      %s289 = scalar_select %p288, %s19, 1
      %s290 = scalar_lea.vmem %s5, %s289
      %p291 = scmp.lt.s32.totalorder %s19, 1
      %s292 = scalar_select %p291, %s19, 1
      %s293 = smul.addr %s292, 4
      %s294 = scalar_lea.vmem %s6, %s293
      %p295 = scmp.lt.s32.totalorder %s19, 1
      %s296 = scalar_select %p295, %s19, 1
      %s297 = smul.addr %s296, 4
      %s298 = scalar_lea.vmem %s7, %s297
      %v300 = vld [vmem:[%s287] sm:$0xf]
      %v301 = vunpack.c.l.bf16 %v300
      %v302 = vld [vmem:[%s1] sm:$0x1]
      %v303 = vld [vmem:[%s2] sm:$0x1]
      %vm304 = vcmask 392192
      %v305 = vsel %vm304, %v301, 0.0
      %306 = vadd.xlane.f32.xlu0 %v305
      %v307 = vpop.xlane.xlu0 %306
      %v308 = vrcp.pop 48.0
      %v309 = vmul.f32 %v307, %v308
      %v310 = vsub.f32 %v301, %v309
      %v311 = vmul.f32 %v310, %v310
      %v312 = vsel %vm304, %v311, 0.0
      %313 = vadd.xlane.f32.xlu0 %v312
      %v314 = vpop.xlane.xlu0 %313
      %v315 = vmul.f32 %v314, %v308
      %v316 = vadd.f32 %v315, 1e-12
      %v317 = vrsqrt.pop %v316
      %v318 = vmul.f32 %v310, %v317
      %v320 = vlaneseq
      %v321 = vshrl.u32 %v320, 7
      %v322 = vsub.s32 0, %v321
      %v323 = vrot.slane %v302, %v322
      %v325 = vmul.f32 %v318, %v323
      %v327 = vlaneseq
      %v328 = vshrl.u32 %v327, 7
      %v329 = vsub.s32 0, %v328
      %v330 = vrot.slane %v303, %v329
      %v332 = vadd.f32 %v325, %v330
      %v333 = vpack.c.bf16 %v332, %v332
      %vm334 = vcmask 388096
      %335 = vst.msk [vmem:[%s294] sm:$0xf] %vm334, %v333
      %v336 = vld [vmem:[%s3] sm:$0xff]
      %v337 = vld [vmem:[%s3 + $0x8] sm:$0xff]
      %v338 = vld [vmem:[%s3 + $0x10] sm:$0xff]
      %v339 = vld [vmem:[%s3 + $0x18] sm:$0xff]
      %v340 = vld [vmem:[%s3 + $0x20] sm:$0xff]
      %v341 = vld [vmem:[%s3 + $0x28] sm:$0xff]
      %v342 = vld [vmem:[%s4] sm:$0x3]
      %v344 = vlaneseq
      %v345 = vshrl.u32 %v344, 7
      %v346 = vsub.s32 0, %v345
      %v347 = vrot.slane %v342, %v346
      %v348 = vlaneseq
      %v349 = vshrl.u32 %v348, 7
      %v350 = vsub.s32 1, %v349
      %v351 = vrot.slane %v342, %v350
      %v360 = vunpack.c.l.b16 %v336
      %v361 = vunpack.c.h.b16 %v336
      %v362 = vunpack.c.l.b16 %v337
      %v363 = vunpack.c.h.b16 %v337
      %v364 = vunpack.c.l.b16 %v338
      %v365 = vunpack.c.h.b16 %v338
      %v366 = vunpack.c.l.b16 %v339
      %v367 = vunpack.c.h.b16 %v339
      %v368 = vunpack.c.l.b16 %v340
      %v369 = vunpack.c.h.b16 %v340
      %v370 = vunpack.c.l.b16 %v341
      %v371 = vunpack.c.h.b16 %v341
      %v372 = vpack.c.b16 %v362, %v360
      %v373 = vpack.c.b16 %v363, %v361
      %v374 = vpack.c.b16 %v366, %v364
      %v375 = vpack.c.b16 %v367, %v365
      %v376 = vpack.c.b16 %v370, %v368
      %v377 = vpack.c.b16 %v371, %v369
      %v385 = vsel %vm304, %v333, 0
      %387 = vmatprep.subr.bf16.mxu0 %v373
      %388 = vmatpush1.bf16.msra.mxu0 %v372
      %389 = vmatprep.subr.bf16.mxu0 %v375
      %390 = vmatpush1.bf16.msra.mxu0 %v374
      %391 = vmatprep.subr.bf16.mxu0 %v377
      %392 = vmatpush1.bf16.msra.mxu0 %v376
      %393 = vmatprep.subr.bf16.mxu0 0
      %394 = vmatpush1.bf16.msra.mxu0 0
      %395 = vmatprep.subr.bf16.mxu0 0
      %396 = vmatpush1.bf16.msra.mxu0 0
      %397 = vmatprep.subr.bf16.mxu0 0
      %398 = vmatpush1.bf16.msra.mxu0 0
      %399 = vmatprep.subr.bf16.mxu0 0
      %400 = vmatpush1.bf16.msra.mxu0 0
      %401 = vmatprep.subr.bf16.mxu0 0
      %402 = vmatpush1.bf16.msra.mxu0 0
      %403 = vmatprep.subr.bf16.mxu0 0
      %404 = vmatpush1.bf16.msra.mxu0 0
      %405 = vmatprep.subr.bf16.mxu0 0
      %406 = vmatpush1.bf16.msra.mxu0 0
      %407 = vmatprep.subr.bf16.mxu0 0
      %408 = vmatpush1.bf16.msra.mxu0 0
      %409 = vmatprep.subr.bf16.mxu0 0
      %410 = vmatpush1.bf16.msra.mxu0 0
      %411 = vmatprep.subr.bf16.mxu0 0
      %412 = vmatpush1.bf16.msra.mxu0 0
      %413 = vmatprep.subr.bf16.mxu0 0
      %414 = vmatpush1.bf16.msra.mxu0 0
      %415 = vmatprep.subr.bf16.mxu0 0
      %416 = vmatpush1.bf16.msra.mxu0 0
      %417 = vmatprep.subr.bf16.mxu0 0
      %418 = vmatpush1.bf16.msra.mxu0 0
      %419 = vmatprep.mubr.bf16.mxu0 0
      %420 = vmatmul.mubr.bf16.gmra.mrb[0].mxu0 %v385
      %v421 = vpop.f32.mrb[0].mxu0
      %v422 = vadd.f32 %v347, %v421
      %v423 = vpop.f32.mrb[0].mxu0
      %v424 = vadd.f32 %v351, %v423
      %v425 = vpop.f32.mrb[0].mxu0
      %v426 = vpop.f32.mrb[0].mxu0
      %427 = vdwg.mxu0
      %v428 = vpack.c.bf16 %v422, %v422
      %v429 = vpack.c.bf16 %v424, %v424
      %431 = vrot.lane.b32.xlu0 %v428, 80
      %v432 = vpop.permute.xlu0 %431
      %v434 = vsel %vm304, %v428, 0
      %v437 = vsel %vm304, %v432, 0
      %439 = vmatprep.subr.bf16.mxu0 0
      %440 = vmatpush1.bf16.xpose.msra.mxu0 %v437
      %441 = vmatprep.subr.bf16.mxu0 0
      %442 = vmatpush1.bf16.xpose.msra.mxu0 0
      %443 = vmatprep.subr.bf16.mxu0 0
      %444 = vmatpush1.bf16.xpose.msra.mxu0 0
      %445 = vmatprep.subr.bf16.mxu0 0
      %446 = vmatpush1.bf16.xpose.msra.mxu0 0
      %447 = vmatprep.subr.bf16.mxu0 0
      %448 = vmatpush1.bf16.xpose.msra.mxu0 0
      %449 = vmatprep.subr.bf16.mxu0 0
      %450 = vmatpush1.bf16.xpose.msra.mxu0 0
      %451 = vmatprep.subr.bf16.mxu0 0
      %452 = vmatpush1.bf16.xpose.msra.mxu0 0
      %453 = vmatprep.subr.bf16.mxu0 0
      %454 = vmatpush1.bf16.xpose.msra.mxu0 0
      %455 = vmatprep.subr.bf16.mxu0 0
      %456 = vmatpush1.bf16.xpose.msra.mxu0 0
      %457 = vmatprep.subr.bf16.mxu0 0
      %458 = vmatpush1.bf16.xpose.msra.mxu0 0
      %459 = vmatprep.subr.bf16.mxu0 0
      %460 = vmatpush1.bf16.xpose.msra.mxu0 0
      %461 = vmatprep.subr.bf16.mxu0 0
      %462 = vmatpush1.bf16.xpose.msra.mxu0 0
      %463 = vmatprep.subr.bf16.mxu0 0
      %464 = vmatpush1.bf16.xpose.msra.mxu0 0
      %465 = vmatprep.subr.bf16.mxu0 0
      %466 = vmatpush1.bf16.xpose.msra.mxu0 0
      %467 = vmatprep.subr.bf16.mxu0 0
      %468 = vmatpush1.bf16.xpose.msra.mxu0 0
      %469 = vmatprep.subr.bf16.mxu0 0
      %470 = vmatpush1.bf16.xpose.msra.mxu0 0
      %471 = vmatprep.mubr.bf16.mxu0 0
      %472 = vmatmul.mubr.bf16.gmra.mrb[0].mxu0 %v434
      %v473 = vpop.f32.mrb[0].mxu0
      %v474 = vadd.f32 0.0, %v473
      %v475 = vpop.f32.mrb[0].mxu0
      %v476 = vpop.f32.mrb[0].mxu0
      %v477 = vpop.f32.mrb[0].mxu0
      %478 = vdwg.mxu0
      %v479 = vmul.f32 %v474, 0.14433756
      %v480 = vld [vmem:[%s290] sm:$0x1]
      %v481 = vsub.f32 1.0, %v480
      %v482 = vmul.f32 %v481, -1e+09
      %v484 = vlaneseq
      %v485 = vshrl.u32 %v484, 7
      %v486 = vsub.s32 0, %v485
      %v487 = vrot.slane %v482, %v486
      %v489 = vadd.f32 %v479, %v487
      %vm490 = vcmask 64512
      %v491 = vsel %vm490, %v489, -inf
      %492 = vmax.xlane.f32.xlu0 %v491
      %v493 = vpop.xlane.xlu0 %492
      %v494 = vsub.f32 %v489, %v493
      %v495 = vmul.f32 %v494, 1.442695
      %v496 = vpow.pop %v495
      %v497 = vsel %vm490, %v496, 0.0
      %498 = vadd.xlane.f32.xlu0 %v497
      %v499 = vpop.xlane.xlu0 %498
      %v500 = vrcp.pop %v499
      %v501 = vmul.f32 %v496, %v500
      %v502 = vpack.c.bf16 %v501, %v501
      %504 = vrot.lane.b32.xlu0 %v428, 32
      %v505 = vpop.permute.xlu0 %504
      %506 = vrot.lane.b32.xlu0 %v429, 32
      %v507 = vpop.permute.xlu0 %506
      %vm508 = vcmask 261120
      %v509 = vsel %vm508, %v505, %v507
      %v511 = vsel %vm490, %v502, 0
      %vm513 = vcmask 1043456
      %v515 = vsel %vm513, %v509, 0
      %517 = vmatprep.subr.bf16.mxu0 0
      %518 = vmatpush1.bf16.msra.mxu0 %v515
      %519 = vmatprep.subr.bf16.mxu0 0
      %520 = vmatpush1.bf16.msra.mxu0 0
      %521 = vmatprep.subr.bf16.mxu0 0
      %522 = vmatpush1.bf16.msra.mxu0 0
      %523 = vmatprep.subr.bf16.mxu0 0
      %524 = vmatpush1.bf16.msra.mxu0 0
      %525 = vmatprep.subr.bf16.mxu0 0
      %526 = vmatpush1.bf16.msra.mxu0 0
      %527 = vmatprep.subr.bf16.mxu0 0
      %528 = vmatpush1.bf16.msra.mxu0 0
      %529 = vmatprep.subr.bf16.mxu0 0
      %530 = vmatpush1.bf16.msra.mxu0 0
      %531 = vmatprep.subr.bf16.mxu0 0
      %532 = vmatpush1.bf16.msra.mxu0 0
      %533 = vmatprep.subr.bf16.mxu0 0
      %534 = vmatpush1.bf16.msra.mxu0 0
      %535 = vmatprep.subr.bf16.mxu0 0
      %536 = vmatpush1.bf16.msra.mxu0 0
      %537 = vmatprep.subr.bf16.mxu0 0
      %538 = vmatpush1.bf16.msra.mxu0 0
      %539 = vmatprep.subr.bf16.mxu0 0
      %540 = vmatpush1.bf16.msra.mxu0 0
      %541 = vmatprep.subr.bf16.mxu0 0
      %542 = vmatpush1.bf16.msra.mxu0 0
      %543 = vmatprep.subr.bf16.mxu0 0
      %544 = vmatpush1.bf16.msra.mxu0 0
      %545 = vmatprep.subr.bf16.mxu0 0
      %546 = vmatpush1.bf16.msra.mxu0 0
      %547 = vmatprep.subr.bf16.mxu0 0
      %548 = vmatpush1.bf16.msra.mxu0 0
      %549 = vmatprep.mubr.bf16.mxu0 0
      %550 = vmatmul.mubr.bf16.gmra.mrb[0].mxu0 %v511
      %v551 = vpop.f32.mrb[0].mxu0
      %v552 = vadd.f32 0.0, %v551
      %v553 = vpop.f32.mrb[0].mxu0
      %v554 = vpop.f32.mrb[0].mxu0
      %v555 = vpop.f32.mrb[0].mxu0
      %556 = vdwg.mxu0
      %v557 = vpack.c.bf16 %v552, %v552
      %558 = vst.msk [vmem:[%s298] sm:$0xf] %vm334, %v557
      %p559 = scmp.lt.s32.totalorder %s19, 1
      %s560 = scalar_select %p559, %s19, 1
      %s561 = smul.addr %s560, 4
      %s562 = scalar_lea.vmem %s6, %s561
      %p563 = scmp.lt.s32.totalorder %s19, 1
      %s564 = scalar_select %p563, %s19, 1
      %s565 = smul.addr %s564, 4
      %s566 = scalar_lea.vmem %s7, %s565
      // Predicated region
      $region45: #{hanzi_forward.8} parent=43 // pred_check
        %p567 = pneg %p173
      $region46: #{hanzi_forward.8} parent=43 // pred_check_branch
        %569 = sbr.rel (%p567) target = $region48
      $region47: #{hanzi_forward.8} parent=43 // pred_region
        _
      $region48: #{hanzi_forward.8} parent=43 // pred_fallthru
        _
      // Predicated region
      $region49: #{hanzi_forward.8} parent=43 // pred_check
        %p570 = pneg %p199
      $region50: #{hanzi_forward.8} parent=43 // pred_check_branch
        %572 = sbr.rel (%p570) target = $region52
      $region51: #{hanzi_forward.8} parent=43 // pred_region
        _
      $region52: #{hanzi_forward.8} parent=43 // pred_fallthru
        _
    $region44: #{hanzi_forward.8} parent=5 // pred_fallthru
      _
    %p573 = scmp.le.s32.totalorder 2, %s14
    // Predicated region
    $region53: #{hanzi_forward.8} parent=5 // pred_check
      %p574 = pneg %p573
    $region54: #{hanzi_forward.8} parent=5 // pred_check_branch
      %576 = sbr.rel (%p574) target = $region56
    $region55: #{hanzi_forward.8} parent=5 // pred_region
      %s577 = ssub.s32 %s14, 2
      // Predicated region
      $region57: #{hanzi_forward.8} parent=55 // pred_check
        %p578 = pneg %p179
      $region58: #{hanzi_forward.8} parent=55 // pred_check_branch
        %580 = sbr.rel (%p578) target = $region60
      $region59: #{hanzi_forward.8} parent=55 // pred_region
        %p581 = scmp.lt.s32.totalorder %s20, 1
        %s582 = scalar_select %p581, %s20, 1
        %s583 = smul.addr %s582, 4
        %s584 = scalar_lea.vmem %s6, %s583
      $region60: #{hanzi_forward.8} parent=55 // pred_fallthru
        _
      // Predicated region
      $region61: #{hanzi_forward.8} parent=55 // pred_check
        %p585 = pneg %p205
      $region62: #{hanzi_forward.8} parent=55 // pred_check_branch
        %587 = sbr.rel (%p585) target = $region64
      $region63: #{hanzi_forward.8} parent=55 // pred_region
        %p588 = scmp.lt.s32.totalorder %s20, 1
        %s589 = scalar_select %p588, %s20, 1
        %s590 = smul.addr %s589, 4
        %s591 = scalar_lea.vmem %s7, %s590
      $region64: #{hanzi_forward.8} parent=55 // pred_fallthru
        _
    $region56: #{hanzi_forward.8} parent=5 // pred_fallthru
      _
  $region6: #{hanzi_forward.8} parent=0 // loop_footer
    %s18 = sadd.s32 1, %s14
  $region7: #{hanzi_forward.8} parent=0 // loop_footer_branch
    %13 = sbr.rel target = $region3
  $region8: #{hanzi_forward.8} parent=0 // loop_exit
    _

// kernel: hanzi_forward.10
$region0: #{hanzi_forward.10}
  #allocation0 [shape = 'u32[]', space=smem, size = 0x4, offset = 0x4, fixed_abs, tag = 'smem constant byte address 0x4 - core index']
  #allocation1 [shape = 'u32[144,128]{1,0:T(1,128)}', space=vmem, size = 0x12000, scoped, tag = 'internal scratch']
  #allocation2 [shape = 'f32[16,48]{1,0:T(8,128)}', space=vmem, size = 0x2000, scoped, tag = 'scratch operand']
  %s0 = inlined_call_operand.vmem [shape: bf16[16,48], index: 0, kind: input, shape index: {}]
  %s1 = inlined_call_operand.vmem [shape: bf16[48,96], index: 1, kind: input, shape index: {}]
  %s2 = inlined_call_operand.vmem [shape: f32[1,96], index: 2, kind: input, shape index: {}]
  %s3 = inlined_call_operand.vmem [shape: bf16[96,48], index: 3, kind: input, shape index: {}]
  %s4 = inlined_call_operand.vmem [shape: f32[1,48], index: 4, kind: input, shape index: {}]
  %s5 = inlined_call_operand.vmem [shape: f32[1,48], index: 5, kind: input, shape index: {}]
  %s6 = inlined_call_operand.vmem [shape: f32[1,48], index: 6, kind: input, shape index: {}]
  %s7 = inlined_call_operand.vmem [shape: bf16[16,48], index: 7, kind: output, shape index: {}]
  %s8 = sld [smem:[#allocation0]]
  $region46: #{hanzi_forward.10} parent=0
    _
  %s10 = ssub.s32 1, %s8
  %s11 = scalar_select 0, %s10, %s8
  // Predicated region
  $region2: #{hanzi_forward.10} parent=0 // pred_check
    _
  $region3: #{hanzi_forward.10} parent=0 // pred_check_branch
    %13 = sbr.rel (0) target = $region5
  $region4: #{hanzi_forward.10} parent=0 // pred_region
    _
  $region5: #{hanzi_forward.10} parent=0 // pred_fallthru
    _
  // Predicated region
  $region6: #{hanzi_forward.10} parent=0 // pred_check
    _
  $region7: #{hanzi_forward.10} parent=0 // pred_check_branch
    %15 = sbr.rel (0) target = $region9
  $region8: #{hanzi_forward.10} parent=0 // pred_region
    _
  $region9: #{hanzi_forward.10} parent=0 // pred_fallthru
    _
  // Predicated region
  $region10: #{hanzi_forward.10} parent=0 // pred_check
    _
  $region11: #{hanzi_forward.10} parent=0 // pred_check_branch
    %17 = sbr.rel (0) target = $region13
  $region12: #{hanzi_forward.10} parent=0 // pred_region
    _
  $region13: #{hanzi_forward.10} parent=0 // pred_fallthru
    _
  // Predicated region
  $region14: #{hanzi_forward.10} parent=0 // pred_check
    _
  $region15: #{hanzi_forward.10} parent=0 // pred_check_branch
    %19 = sbr.rel (0) target = $region17
  $region16: #{hanzi_forward.10} parent=0 // pred_region
    _
  $region17: #{hanzi_forward.10} parent=0 // pred_fallthru
    _
  // Predicated region
  $region18: #{hanzi_forward.10} parent=0 // pred_check
    _
  $region19: #{hanzi_forward.10} parent=0 // pred_check_branch
    %21 = sbr.rel (0) target = $region21
  $region20: #{hanzi_forward.10} parent=0 // pred_region
    _
  $region21: #{hanzi_forward.10} parent=0 // pred_fallthru
    _
  // Predicated region
  $region22: #{hanzi_forward.10} parent=0 // pred_check
    _
  $region23: #{hanzi_forward.10} parent=0 // pred_check_branch
    %23 = sbr.rel (0) target = $region25
  $region24: #{hanzi_forward.10} parent=0 // pred_region
    _
  $region25: #{hanzi_forward.10} parent=0 // pred_fallthru
    _
  // Predicated region
  $region26: #{hanzi_forward.10} parent=0 // pred_check
    _
  $region27: #{hanzi_forward.10} parent=0 // pred_check_branch
    %25 = sbr.rel (0) target = $region29
  $region28: #{hanzi_forward.10} parent=0 // pred_region
    _
  $region29: #{hanzi_forward.10} parent=0 // pred_fallthru
    _
  %p27 = scmp.eq.s32.totalorder 0, 0
  // Predicated region
  $region30: #{hanzi_forward.10} parent=0 // pred_check
    %p28 = pneg %p27
  $region31: #{hanzi_forward.10} parent=0 // pred_check_branch
    %30 = sbr.rel (%p28) target = $region33
  $region32: #{hanzi_forward.10} parent=0 // pred_region
    %vm31 = vcmask 392192
    %32 = vst.msk [vmem:[#allocation2] sm:$0xff] %vm31, 0.0
    %33 = vst.msk [vmem:[#allocation2 + $0x8] sm:$0xff] %vm31, 0.0
  $region33: #{hanzi_forward.10} parent=0 // pred_fallthru
    _
  %v34 = vld [vmem:[%s0] sm:$0xf]
  %v35 = vld [vmem:[%s0 + $0x4] sm:$0xf]
  %v36 = vld [vmem:[%s1] sm:$0xf]
  %v37 = vld [vmem:[%s1 + $0x4] sm:$0xf]
  %v38 = vld [vmem:[%s1 + $0x8] sm:$0xf]
  %v39 = vld [vmem:[%s1 + $0xc] sm:$0xf]
  %v40 = vld [vmem:[%s1 + $0x10] sm:$0xf]
  %v41 = vld [vmem:[%s1 + $0x14] sm:$0xf]
  %v42 = vld [vmem:[%s2] sm:$0x1]
  %v44 = vlaneseq
  %v45 = vshrl.u32 %v44, 7
  %v46 = vsub.s32 0, %v45
  %v47 = vrot.slane %v42, %v46
  %v51 = vunpack.c.l.b16 %v34
  %v52 = vunpack.c.l.b16 %v35
  %v53 = vpack.c.b16 %v52, %v51
  %v60 = vunpack.c.l.b16 %v36
  %v61 = vunpack.c.l.b16 %v37
  %v62 = vunpack.c.l.b16 %v38
  %v63 = vunpack.c.l.b16 %v39
  %v64 = vunpack.c.l.b16 %v40
  %v65 = vunpack.c.l.b16 %v41
  %v66 = vpack.c.b16 %v61, %v60
  %v67 = vpack.c.b16 %v63, %v62
  %v68 = vpack.c.b16 %v65, %v64
  %vm72 = vcmask 392192
  %v74 = vsel %vm72, %v53, 0
  %76 = vmatprep.subr.bf16.mxu0 0
  %77 = vmatpush1.bf16.msra.mxu0 %v66
  %78 = vmatprep.subr.bf16.mxu0 0
  %79 = vmatpush1.bf16.msra.mxu0 %v67
  %80 = vmatprep.subr.bf16.mxu0 0
  %81 = vmatpush1.bf16.msra.mxu0 %v68
  %82 = vmatprep.subr.bf16.mxu0 0
  %83 = vmatpush1.bf16.msra.mxu0 0
  %84 = vmatprep.subr.bf16.mxu0 0
  %85 = vmatpush1.bf16.msra.mxu0 0
  %86 = vmatprep.subr.bf16.mxu0 0
  %87 = vmatpush1.bf16.msra.mxu0 0
  %88 = vmatprep.subr.bf16.mxu0 0
  %89 = vmatpush1.bf16.msra.mxu0 0
  %90 = vmatprep.subr.bf16.mxu0 0
  %91 = vmatpush1.bf16.msra.mxu0 0
  %92 = vmatprep.subr.bf16.mxu0 0
  %93 = vmatpush1.bf16.msra.mxu0 0
  %94 = vmatprep.subr.bf16.mxu0 0
  %95 = vmatpush1.bf16.msra.mxu0 0
  %96 = vmatprep.subr.bf16.mxu0 0
  %97 = vmatpush1.bf16.msra.mxu0 0
  %98 = vmatprep.subr.bf16.mxu0 0
  %99 = vmatpush1.bf16.msra.mxu0 0
  %100 = vmatprep.subr.bf16.mxu0 0
  %101 = vmatpush1.bf16.msra.mxu0 0
  %102 = vmatprep.subr.bf16.mxu0 0
  %103 = vmatpush1.bf16.msra.mxu0 0
  %104 = vmatprep.subr.bf16.mxu0 0
  %105 = vmatpush1.bf16.msra.mxu0 0
  %106 = vmatprep.subr.bf16.mxu0 0
  %107 = vmatpush1.bf16.msra.mxu0 0
  %108 = vmatprep.mubr.bf16.mxu0 0
  %109 = vmatmul.mubr.bf16.gmra.mrb[0].mxu0 %v74
  %v110 = vpop.f32.mrb[0].mxu0
  %v111 = vadd.f32 %v47, %v110
  %v112 = vpop.f32.mrb[0].mxu0
  %v113 = vpop.f32.mrb[0].mxu0
  %v114 = vadd.f32 %v47, %v113
  %v115 = vpop.f32.mrb[0].mxu0
  %116 = vdwg.mxu0
  %v117 = vmul.f32 %v111, %v111
  %v118 = vmul.f32 %v114, %v114
  %v119 = vmul.f32 %v111, %v117
  %v120 = vmul.f32 %v114, %v118
  %v121 = vmul.f32 %v119, 0.044715
  %v122 = vmul.f32 %v120, 0.044715
  %v123 = vadd.f32 %v111, %v121
  %v124 = vadd.f32 %v114, %v122
  %v125 = vmul.f32 %v123, 0.7978846
  %v126 = vmul.f32 %v124, 0.7978846
  %v127 = vtanh.pop %v125
  %v128 = vtanh.pop %v126
  %v129 = vadd.f32 %v127, 1.0
  %v130 = vadd.f32 %v128, 1.0
  %v131 = vmul.f32 %v129, 0.5
  %v132 = vmul.f32 %v130, 0.5
  %v133 = vmul.f32 %v111, %v131
  %v134 = vmul.f32 %v114, %v132
  %v135 = vld [vmem:[#allocation2] sm:$0xff]
  %v136 = vld [vmem:[#allocation2 + $0x8] sm:$0xff]
  %v137 = vpack.c.bf16 %v134, %v133
  %v138 = vld [vmem:[%s3] sm:$0xf]
  %v139 = vld [vmem:[%s3 + $0x4] sm:$0xf]
  %v140 = vld [vmem:[%s3 + $0x8] sm:$0xf]
  %v141 = vld [vmem:[%s3 + $0xc] sm:$0xf]
  %v142 = vld [vmem:[%s3 + $0x10] sm:$0xf]
  %v143 = vld [vmem:[%s3 + $0x14] sm:$0xf]
  %v144 = vld [vmem:[%s3 + $0x18] sm:$0xf]
  %v145 = vld [vmem:[%s3 + $0x1c] sm:$0xf]
  %v146 = vld [vmem:[%s3 + $0x20] sm:$0xf]
  %v147 = vld [vmem:[%s3 + $0x24] sm:$0xf]
  %v148 = vld [vmem:[%s3 + $0x28] sm:$0xf]
  %v149 = vld [vmem:[%s3 + $0x2c] sm:$0xf]
  %v162 = vunpack.c.l.b16 %v138
  %v163 = vunpack.c.l.b16 %v139
  %v164 = vunpack.c.l.b16 %v140
  %v165 = vunpack.c.l.b16 %v141
  %v166 = vunpack.c.l.b16 %v142
  %v167 = vunpack.c.l.b16 %v143
  %v168 = vunpack.c.l.b16 %v144
  %v169 = vunpack.c.l.b16 %v145
  %v170 = vunpack.c.l.b16 %v146
  %v171 = vunpack.c.l.b16 %v147
  %v172 = vunpack.c.l.b16 %v148
  %v173 = vunpack.c.l.b16 %v149
  %v174 = vpack.c.b16 %v163, %v162
  %v175 = vpack.c.b16 %v165, %v164
  %v176 = vpack.c.b16 %v167, %v166
  %v177 = vpack.c.b16 %v169, %v168
  %v178 = vpack.c.b16 %v171, %v170
  %v179 = vpack.c.b16 %v173, %v172
  %vm186 = vcmask 785408
  %v188 = vsel %vm186, %v137, 0
  %190 = vmatprep.subr.bf16.mxu0 0
  %191 = vmatpush1.bf16.msra.mxu0 %v174
  %192 = vmatprep.subr.bf16.mxu0 0
  %193 = vmatpush1.bf16.msra.mxu0 %v175
  %194 = vmatprep.subr.bf16.mxu0 0
  %195 = vmatpush1.bf16.msra.mxu0 %v176
  %196 = vmatprep.subr.bf16.mxu0 0
  %197 = vmatpush1.bf16.msra.mxu0 %v177
  %198 = vmatprep.subr.bf16.mxu0 0
  %199 = vmatpush1.bf16.msra.mxu0 %v178
  %200 = vmatprep.subr.bf16.mxu0 0
  %201 = vmatpush1.bf16.msra.mxu0 %v179
  %202 = vmatprep.subr.bf16.mxu0 0
  %203 = vmatpush1.bf16.msra.mxu0 0
  %204 = vmatprep.subr.bf16.mxu0 0
  %205 = vmatpush1.bf16.msra.mxu0 0
  %206 = vmatprep.subr.bf16.mxu0 0
  %207 = vmatpush1.bf16.msra.mxu0 0
  %208 = vmatprep.subr.bf16.mxu0 0
  %209 = vmatpush1.bf16.msra.mxu0 0
  %210 = vmatprep.subr.bf16.mxu0 0
  %211 = vmatpush1.bf16.msra.mxu0 0
  %212 = vmatprep.subr.bf16.mxu0 0
  %213 = vmatpush1.bf16.msra.mxu0 0
  %214 = vmatprep.subr.bf16.mxu0 0
  %215 = vmatpush1.bf16.msra.mxu0 0
  %216 = vmatprep.subr.bf16.mxu0 0
  %217 = vmatpush1.bf16.msra.mxu0 0
  %218 = vmatprep.subr.bf16.mxu0 0
  %219 = vmatpush1.bf16.msra.mxu0 0
  %220 = vmatprep.subr.bf16.mxu0 0
  %221 = vmatpush1.bf16.msra.mxu0 0
  %222 = vmatprep.mubr.bf16.mxu0 0
  %223 = vmatmul.mubr.bf16.gmra.mrb[0].mxu0 %v188
  %v224 = vpop.f32.mrb[0].mxu0
  %v225 = vadd.f32 0.0, %v224
  %v226 = vpop.f32.mrb[0].mxu0
  %v227 = vpop.f32.mrb[0].mxu0
  %v228 = vadd.f32 0.0, %v227
  %v229 = vpop.f32.mrb[0].mxu0
  %230 = vdwg.mxu0
  %v231 = vadd.f32 %v135, %v225
  %v232 = vadd.f32 %v136, %v228
  %233 = vst.msk [vmem:[#allocation2] sm:$0xff] %vm72, %v231
  %234 = vst.msk [vmem:[#allocation2 + $0x8] sm:$0xff] %vm72, %v232
  // Predicated region
  $region34: #{hanzi_forward.10} parent=0 // pred_check
    %p235 = pneg %p27
  $region35: #{hanzi_forward.10} parent=0 // pred_check_branch
    %237 = sbr.rel (%p235) target = $region37
  $region36: #{hanzi_forward.10} parent=0 // pred_region
    %v238 = vld [vmem:[#allocation2] sm:$0xff]
    %v239 = vld [vmem:[#allocation2 + $0x8] sm:$0xff]
    %v240 = vld [vmem:[%s4] sm:$0x1]
    %v242 = vlaneseq
    %v243 = vshrl.u32 %v242, 7
    %v244 = vsub.s32 0, %v243
    %v245 = vrot.slane %v240, %v244
    %v247 = vadd.f32 %v238, %v245
    %v248 = vadd.f32 %v239, %v245
    %v249 = vunpack.c.l.bf16 %v34
    %v250 = vunpack.c.l.bf16 %v35
    %v251 = vadd.f32 %v247, %v249
    %v252 = vadd.f32 %v248, %v250
    %v253 = vld [vmem:[%s5] sm:$0x1]
    %v254 = vld [vmem:[%s6] sm:$0x1]
    %v255 = vsel %vm72, %v251, 0.0
    %256 = vadd.xlane.f32.xlu0 %v255
    %v257 = vpop.xlane.xlu0 %256
    %v258 = vsel %vm72, %v252, 0.0
    %259 = vadd.xlane.f32.xlu0 %v258
    %v260 = vpop.xlane.xlu0 %259
    %v261 = vrcp.pop 48.0
    %v262 = vmul.f32 %v257, %v261
    %v263 = vmul.f32 %v260, %v261
    %v264 = vsub.f32 %v251, %v262
    %v265 = vsub.f32 %v252, %v263
    %v266 = vmul.f32 %v264, %v264
    %v267 = vmul.f32 %v265, %v265
    %v268 = vsel %vm72, %v266, 0.0
    %269 = vadd.xlane.f32.xlu0 %v268
    %v270 = vpop.xlane.xlu0 %269
    %v271 = vsel %vm72, %v267, 0.0
    %272 = vadd.xlane.f32.xlu0 %v271
    %v273 = vpop.xlane.xlu0 %272
    %v274 = vmul.f32 %v270, %v261
    %v275 = vmul.f32 %v273, %v261
    %v276 = vadd.f32 %v274, 1e-12
    %v277 = vadd.f32 %v275, 1e-12
    %v278 = vrsqrt.pop %v276
    %v279 = vrsqrt.pop %v277
    %v280 = vmul.f32 %v264, %v278
    %v281 = vmul.f32 %v265, %v279
    %v283 = vlaneseq
    %v284 = vshrl.u32 %v283, 7
    %v285 = vsub.s32 0, %v284
    %v286 = vrot.slane %v253, %v285
    %v288 = vmul.f32 %v280, %v286
    %v289 = vmul.f32 %v281, %v286
    %v291 = vlaneseq
    %v292 = vshrl.u32 %v291, 7
    %v293 = vsub.s32 0, %v292
    %v294 = vrot.slane %v254, %v293
    %v296 = vadd.f32 %v288, %v294
    %v297 = vadd.f32 %v289, %v294
    %v298 = vpack.c.bf16 %v297, %v296
    %v300 = vunpack.c.l.b16 %v298
    %v301 = vunpack.c.h.b16 %v298
    %v302 = vpack.c.b16 %v300, %v300
    %v303 = vpack.c.b16 %v301, %v301
    %vm306 = vcmask 388096
    %307 = vst.msk [vmem:[%s7] sm:$0xf] %vm306, %v302
    %308 = vst.msk [vmem:[%s7 + $0x4] sm:$0xf] %vm306, %v303
  $region37: #{hanzi_forward.10} parent=0 // pred_fallthru
    _
  // Predicated region
  $region38: #{hanzi_forward.10} parent=0 // pred_check
    _
  $region39: #{hanzi_forward.10} parent=0 // pred_check_branch
    %310 = sbr.rel (0) target = $region41
  $region40: #{hanzi_forward.10} parent=0 // pred_region
    _
  $region41: #{hanzi_forward.10} parent=0 // pred_fallthru
    _
  // Predicated region
  $region42: #{hanzi_forward.10} parent=0 // pred_check
    _
  $region43: #{hanzi_forward.10} parent=0 // pred_check_branch
    %312 = sbr.rel (0) target = $region45
  $region44: #{hanzi_forward.10} parent=0 // pred_region
    _
  $region45: #{hanzi_forward.10} parent=0 // pred_fallthru
    _

// kernel: hanzi_forward.13
$region0: #{hanzi_forward.13}
  #allocation0 [shape = 'u32[]', space=smem, size = 0x4, offset = 0x4, fixed_abs, tag = 'smem constant byte address 0x4 - core index']
  #allocation1 [shape = 'u32[144,128]{1,0:T(1,128)}', space=vmem, size = 0x12000, scoped, tag = 'internal scratch']
  %s0 = inlined_call_operand.vmem [shape: bf16[16,48], index: 0, kind: input, shape index: {}]
  %s1 = inlined_call_operand.vmem [shape: bf16[48,128], index: 1, kind: input, shape index: {}]
  %s2 = inlined_call_operand.vmem [shape: f32[1,128], index: 2, kind: input, shape index: {}]
  %s3 = inlined_call_operand.vmem [shape: bf16[16,128], index: 3, kind: output, shape index: {}]
  %s4 = sld [smem:[#allocation0]]
  $region22: #{hanzi_forward.13} parent=0
    _
  %s6 = ssub.s32 1, %s4
  %s7 = scalar_select 0, %s6, %s4
  // Predicated region
  $region2: #{hanzi_forward.13} parent=0 // pred_check
    _
  $region3: #{hanzi_forward.13} parent=0 // pred_check_branch
    %9 = sbr.rel (0) target = $region5
  $region4: #{hanzi_forward.13} parent=0 // pred_region
    _
  $region5: #{hanzi_forward.13} parent=0 // pred_fallthru
    _
  // Predicated region
  $region6: #{hanzi_forward.13} parent=0 // pred_check
    _
  $region7: #{hanzi_forward.13} parent=0 // pred_check_branch
    %11 = sbr.rel (0) target = $region9
  $region8: #{hanzi_forward.13} parent=0 // pred_region
    _
  $region9: #{hanzi_forward.13} parent=0 // pred_fallthru
    _
  // Predicated region
  $region10: #{hanzi_forward.13} parent=0 // pred_check
    _
  $region11: #{hanzi_forward.13} parent=0 // pred_check_branch
    %13 = sbr.rel (0) target = $region13
  $region12: #{hanzi_forward.13} parent=0 // pred_region
    _
  $region13: #{hanzi_forward.13} parent=0 // pred_fallthru
    _
  %v15 = vld [vmem:[%s0] sm:$0xf]
  %v16 = vld [vmem:[%s0 + $0x4] sm:$0xf]
  %v17 = vld [vmem:[%s1] sm:$0xf]
  %v18 = vld [vmem:[%s1 + $0x4] sm:$0xf]
  %v19 = vld [vmem:[%s1 + $0x8] sm:$0xf]
  %v20 = vld [vmem:[%s1 + $0xc] sm:$0xf]
  %v21 = vld [vmem:[%s1 + $0x10] sm:$0xf]
  %v22 = vld [vmem:[%s1 + $0x14] sm:$0xf]
  %v23 = vld [vmem:[%s2] sm:$0x1]
  %v25 = vlaneseq
  %v26 = vshrl.u32 %v25, 7
  %v27 = vsub.s32 0, %v26
  %v28 = vrot.slane %v23, %v27
  %v32 = vunpack.c.l.b16 %v15
  %v33 = vunpack.c.l.b16 %v16
  %v34 = vpack.c.b16 %v33, %v32
  %v41 = vunpack.c.l.b16 %v17
  %v42 = vunpack.c.l.b16 %v18
  %v43 = vunpack.c.l.b16 %v19
  %v44 = vunpack.c.l.b16 %v20
  %v45 = vunpack.c.l.b16 %v21
  %v46 = vunpack.c.l.b16 %v22
  %v47 = vpack.c.b16 %v42, %v41
  %v48 = vpack.c.b16 %v44, %v43
  %v49 = vpack.c.b16 %v46, %v45
  %vm53 = vcmask 392192
  %v55 = vsel %vm53, %v34, 0
  %57 = vmatprep.subr.bf16.mxu0 0
  %58 = vmatpush1.bf16.msra.mxu0 %v47
  %59 = vmatprep.subr.bf16.mxu0 0
  %60 = vmatpush1.bf16.msra.mxu0 %v48
  %61 = vmatprep.subr.bf16.mxu0 0
  %62 = vmatpush1.bf16.msra.mxu0 %v49
  %63 = vmatprep.subr.bf16.mxu0 0
  %64 = vmatpush1.bf16.msra.mxu0 0
  %65 = vmatprep.subr.bf16.mxu0 0
  %66 = vmatpush1.bf16.msra.mxu0 0
  %67 = vmatprep.subr.bf16.mxu0 0
  %68 = vmatpush1.bf16.msra.mxu0 0
  %69 = vmatprep.subr.bf16.mxu0 0
  %70 = vmatpush1.bf16.msra.mxu0 0
  %71 = vmatprep.subr.bf16.mxu0 0
  %72 = vmatpush1.bf16.msra.mxu0 0
  %73 = vmatprep.subr.bf16.mxu0 0
  %74 = vmatpush1.bf16.msra.mxu0 0
  %75 = vmatprep.subr.bf16.mxu0 0
  %76 = vmatpush1.bf16.msra.mxu0 0
  %77 = vmatprep.subr.bf16.mxu0 0
  %78 = vmatpush1.bf16.msra.mxu0 0
  %79 = vmatprep.subr.bf16.mxu0 0
  %80 = vmatpush1.bf16.msra.mxu0 0
  %81 = vmatprep.subr.bf16.mxu0 0
  %82 = vmatpush1.bf16.msra.mxu0 0
  %83 = vmatprep.subr.bf16.mxu0 0
  %84 = vmatpush1.bf16.msra.mxu0 0
  %85 = vmatprep.subr.bf16.mxu0 0
  %86 = vmatpush1.bf16.msra.mxu0 0
  %87 = vmatprep.subr.bf16.mxu0 0
  %88 = vmatpush1.bf16.msra.mxu0 0
  %89 = vmatprep.mubr.bf16.mxu0 0
  %90 = vmatmul.mubr.bf16.gmra.mrb[0].mxu0 %v55
  %v91 = vpop.f32.mrb[0].mxu0
  %v92 = vadd.f32 %v28, %v91
  %v93 = vpop.f32.mrb[0].mxu0
  %v94 = vpop.f32.mrb[0].mxu0
  %v95 = vadd.f32 %v28, %v94
  %v96 = vpop.f32.mrb[0].mxu0
  %97 = vdwg.mxu0
  %v98 = vpack.c.bf16 %v95, %v92
  %v100 = vunpack.c.l.b16 %v98
  %v101 = vunpack.c.h.b16 %v98
  %v102 = vpack.c.b16 %v100, %v100
  %v103 = vpack.c.b16 %v101, %v101
  %106 = vst [vmem:[%s3] sm:$0xf] %v102
  %107 = vst [vmem:[%s3 + $0x4] sm:$0xf] %v103
  // Predicated region
  $region14: #{hanzi_forward.13} parent=0 // pred_check
    _
  $region15: #{hanzi_forward.13} parent=0 // pred_check_branch
    %109 = sbr.rel (0) target = $region17
  $region16: #{hanzi_forward.13} parent=0 // pred_region
    _
  $region17: #{hanzi_forward.13} parent=0 // pred_fallthru
    _
  // Predicated region
  $region18: #{hanzi_forward.13} parent=0 // pred_check
    _
  $region19: #{hanzi_forward.13} parent=0 // pred_check_branch
    %111 = sbr.rel (0) target = $region21
  $region20: #{hanzi_forward.13} parent=0 // pred_region
    _
  $region21: #{hanzi_forward.13} parent=0 // pred_fallthru
    _

// kernel: hanzi_forward.11
$region0: #{hanzi_forward.11}
  #allocation0 [shape = 'u32[]', space=smem, size = 0x4, offset = 0x4, fixed_abs, tag = 'smem constant byte address 0x4 - core index']
  #allocation1 [shape = 'u32[144,128]{1,0:T(1,128)}', space=vmem, size = 0x12000, scoped, tag = 'internal scratch']
  %s0 = inlined_call_operand.vmem [shape: bf16[16,48], index: 0, kind: input, shape index: {}]
  %s1 = inlined_call_operand.vmem [shape: bf16[16,16], index: 1, kind: input, shape index: {}]
  %s2 = inlined_call_operand.vmem [shape: bf16[16,16], index: 2, kind: input, shape index: {}]
  %s3 = inlined_call_operand.vmem [shape: bf16[16,16], index: 3, kind: input, shape index: {}]
  %s4 = inlined_call_operand.vmem [shape: bf16[16,48], index: 4, kind: input, shape index: {}]
  %s5 = inlined_call_operand.vmem [shape: bf16[16,48], index: 5, kind: input, shape index: {}]
  %s6 = inlined_call_operand.vmem [shape: bf16[16,48], index: 6, kind: input, shape index: {}]
  %s7 = inlined_call_operand.vmem [shape: f32[1,48], index: 7, kind: input, shape index: {}]
  %s8 = inlined_call_operand.vmem [shape: bf16[48,48], index: 8, kind: input, shape index: {}]
  %s9 = inlined_call_operand.vmem [shape: bf16[48,48], index: 9, kind: input, shape index: {}]
  %s10 = inlined_call_operand.vmem [shape: f32[1,48], index: 10, kind: input, shape index: {}]
  %s11 = inlined_call_operand.vmem [shape: f32[1,48], index: 11, kind: input, shape index: {}]
  %s12 = inlined_call_operand.vmem [shape: f32[1,48], index: 12, kind: input, shape index: {}]
  %s13 = inlined_call_operand.vmem [shape: bf16[16,48], index: 13, kind: output, shape index: {}]
  %s14 = sld [smem:[#allocation0]]
  $region62: #{hanzi_forward.11} parent=0
    _
  %s16 = ssub.s32 1, %s14
  %s17 = scalar_select 0, %s16, %s14
  // Predicated region
  $region2: #{hanzi_forward.11} parent=0 // pred_check
    _
  $region3: #{hanzi_forward.11} parent=0 // pred_check_branch
    %19 = sbr.rel (0) target = $region5
  $region4: #{hanzi_forward.11} parent=0 // pred_region
    _
  $region5: #{hanzi_forward.11} parent=0 // pred_fallthru
    _
  // Predicated region
  $region6: #{hanzi_forward.11} parent=0 // pred_check
    _
  $region7: #{hanzi_forward.11} parent=0 // pred_check_branch
    %21 = sbr.rel (0) target = $region9
  $region8: #{hanzi_forward.11} parent=0 // pred_region
    _
  $region9: #{hanzi_forward.11} parent=0 // pred_fallthru
    _
  // Predicated region
  $region10: #{hanzi_forward.11} parent=0 // pred_check
    _
  $region11: #{hanzi_forward.11} parent=0 // pred_check_branch
    %23 = sbr.rel (0) target = $region13
  $region12: #{hanzi_forward.11} parent=0 // pred_region
    _
  $region13: #{hanzi_forward.11} parent=0 // pred_fallthru
    _
  // Predicated region
  $region14: #{hanzi_forward.11} parent=0 // pred_check
    _
  $region15: #{hanzi_forward.11} parent=0 // pred_check_branch
    %25 = sbr.rel (0) target = $region17
  $region16: #{hanzi_forward.11} parent=0 // pred_region
    _
  $region17: #{hanzi_forward.11} parent=0 // pred_fallthru
    _
  // Predicated region
  $region18: #{hanzi_forward.11} parent=0 // pred_check
    _
  $region19: #{hanzi_forward.11} parent=0 // pred_check_branch
    %27 = sbr.rel (0) target = $region21
  $region20: #{hanzi_forward.11} parent=0 // pred_region
    _
  $region21: #{hanzi_forward.11} parent=0 // pred_fallthru
    _
  // Predicated region
  $region22: #{hanzi_forward.11} parent=0 // pred_check
    _
  $region23: #{hanzi_forward.11} parent=0 // pred_check_branch
    %29 = sbr.rel (0) target = $region25
  $region24: #{hanzi_forward.11} parent=0 // pred_region
    _
  $region25: #{hanzi_forward.11} parent=0 // pred_fallthru
    _
  // Predicated region
  $region26: #{hanzi_forward.11} parent=0 // pred_check
    _
  $region27: #{hanzi_forward.11} parent=0 // pred_check_branch
    %31 = sbr.rel (0) target = $region29
  $region28: #{hanzi_forward.11} parent=0 // pred_region
    _
  $region29: #{hanzi_forward.11} parent=0 // pred_fallthru
    _
  // Predicated region
  $region30: #{hanzi_forward.11} parent=0 // pred_check
    _
  $region31: #{hanzi_forward.11} parent=0 // pred_check_branch
    %33 = sbr.rel (0) target = $region33
  $region32: #{hanzi_forward.11} parent=0 // pred_region
    _
  $region33: #{hanzi_forward.11} parent=0 // pred_fallthru
    _
  // Predicated region
  $region34: #{hanzi_forward.11} parent=0 // pred_check
    _
  $region35: #{hanzi_forward.11} parent=0 // pred_check_branch
    %35 = sbr.rel (0) target = $region37
  $region36: #{hanzi_forward.11} parent=0 // pred_region
    _
  $region37: #{hanzi_forward.11} parent=0 // pred_fallthru
    _
  // Predicated region
  $region38: #{hanzi_forward.11} parent=0 // pred_check
    _
  $region39: #{hanzi_forward.11} parent=0 // pred_check_branch
    %37 = sbr.rel (0) target = $region41
  $region40: #{hanzi_forward.11} parent=0 // pred_region
    _
  $region41: #{hanzi_forward.11} parent=0 // pred_fallthru
    _
  // Predicated region
  $region42: #{hanzi_forward.11} parent=0 // pred_check
    _
  $region43: #{hanzi_forward.11} parent=0 // pred_check_branch
    %39 = sbr.rel (0) target = $region45
  $region44: #{hanzi_forward.11} parent=0 // pred_region
    _
  $region45: #{hanzi_forward.11} parent=0 // pred_fallthru
    _
  // Predicated region
  $region46: #{hanzi_forward.11} parent=0 // pred_check
    _
  $region47: #{hanzi_forward.11} parent=0 // pred_check_branch
    %41 = sbr.rel (0) target = $region49
  $region48: #{hanzi_forward.11} parent=0 // pred_region
    _
  $region49: #{hanzi_forward.11} parent=0 // pred_fallthru
    _
  // Predicated region
  $region50: #{hanzi_forward.11} parent=0 // pred_check
    _
  $region51: #{hanzi_forward.11} parent=0 // pred_check_branch
    %43 = sbr.rel (0) target = $region53
  $region52: #{hanzi_forward.11} parent=0 // pred_region
    _
  $region53: #{hanzi_forward.11} parent=0 // pred_fallthru
    _
  %v45 = vld [vmem:[%s1] sm:$0xf]
  %v46 = vld [vmem:[%s1 + $0x4] sm:$0xf]
  %v47 = vld [vmem:[%s4] sm:$0xf]
  %v48 = vld [vmem:[%s4 + $0x4] sm:$0xf]
  %v49 = vld [vmem:[%s2] sm:$0xf]
  %v50 = vld [vmem:[%s2 + $0x4] sm:$0xf]
  %v51 = vld [vmem:[%s5] sm:$0xf]
  %v52 = vld [vmem:[%s5 + $0x4] sm:$0xf]
  %v55 = vunpack.c.l.b16 %v49
  %v56 = vunpack.c.l.b16 %v50
  %v57 = vpack.c.b16 %v56, %v55
  %v60 = vunpack.c.l.b16 %v51
  %v61 = vunpack.c.l.b16 %v52
  %v62 = vpack.c.b16 %v61, %v60
  %vm64 = vcmask 130048
  %v66 = vsel %vm64, %v57, 0
  %68 = vmatprep.subr.bf16.mxu0 0
  %69 = vmatpush1.bf16.msra.mxu0 %v62
  %70 = vmatprep.subr.bf16.mxu0 0
  %71 = vmatpush1.bf16.msra.mxu0 0
  %72 = vmatprep.subr.bf16.mxu0 0
  %73 = vmatpush1.bf16.msra.mxu0 0
  %74 = vmatprep.subr.bf16.mxu0 0
  %75 = vmatpush1.bf16.msra.mxu0 0
  %76 = vmatprep.subr.bf16.mxu0 0
  %77 = vmatpush1.bf16.msra.mxu0 0
  %78 = vmatprep.subr.bf16.mxu0 0
  %79 = vmatpush1.bf16.msra.mxu0 0
  %80 = vmatprep.subr.bf16.mxu0 0
  %81 = vmatpush1.bf16.msra.mxu0 0
  %82 = vmatprep.subr.bf16.mxu0 0
  %83 = vmatpush1.bf16.msra.mxu0 0
  %84 = vmatprep.subr.bf16.mxu0 0
  %85 = vmatpush1.bf16.msra.mxu0 0
  %86 = vmatprep.subr.bf16.mxu0 0
  %87 = vmatpush1.bf16.msra.mxu0 0
  %88 = vmatprep.subr.bf16.mxu0 0
  %89 = vmatpush1.bf16.msra.mxu0 0
  %90 = vmatprep.subr.bf16.mxu0 0
  %91 = vmatpush1.bf16.msra.mxu0 0
  %92 = vmatprep.subr.bf16.mxu0 0
  %93 = vmatpush1.bf16.msra.mxu0 0
  %94 = vmatprep.subr.bf16.mxu0 0
  %95 = vmatpush1.bf16.msra.mxu0 0
  %96 = vmatprep.subr.bf16.mxu0 0
  %97 = vmatpush1.bf16.msra.mxu0 0
  %98 = vmatprep.subr.bf16.mxu0 0
  %99 = vmatpush1.bf16.msra.mxu0 0
  %100 = vmatprep.mubr.bf16.mxu0 0
  %101 = vmatmul.mubr.bf16.gmra.mrb[0].mxu0 %v66
  %v102 = vpop.f32.mrb[0].mxu0
  %v103 = vadd.f32 0.0, %v102
  %v104 = vpop.f32.mrb[0].mxu0
  %v105 = vpop.f32.mrb[0].mxu0
  %v106 = vadd.f32 0.0, %v105
  %v107 = vpop.f32.mrb[0].mxu0
  %108 = vdwg.mxu0
  %v111 = vunpack.c.l.b16 %v45
  %v112 = vunpack.c.l.b16 %v46
  %v113 = vpack.c.b16 %v112, %v111
  %v116 = vunpack.c.l.b16 %v47
  %v117 = vunpack.c.l.b16 %v48
  %v118 = vpack.c.b16 %v117, %v116
  %v121 = vsel %vm64, %v113, 0
  %123 = vmatprep.subr.bf16.mxu0 0
  %124 = vmatpush1.bf16.msra.mxu0 %v118
  %125 = vmatprep.subr.bf16.mxu0 0
  %126 = vmatpush1.bf16.msra.mxu0 0
  %127 = vmatprep.subr.bf16.mxu0 0
  %128 = vmatpush1.bf16.msra.mxu0 0
  %129 = vmatprep.subr.bf16.mxu0 0
  %130 = vmatpush1.bf16.msra.mxu0 0
  %131 = vmatprep.subr.bf16.mxu0 0
  %132 = vmatpush1.bf16.msra.mxu0 0
  %133 = vmatprep.subr.bf16.mxu0 0
  %134 = vmatpush1.bf16.msra.mxu0 0
  %135 = vmatprep.subr.bf16.mxu0 0
  %136 = vmatpush1.bf16.msra.mxu0 0
  %137 = vmatprep.subr.bf16.mxu0 0
  %138 = vmatpush1.bf16.msra.mxu0 0
  %139 = vmatprep.subr.bf16.mxu0 0
  %140 = vmatpush1.bf16.msra.mxu0 0
  %141 = vmatprep.subr.bf16.mxu0 0
  %142 = vmatpush1.bf16.msra.mxu0 0
  %143 = vmatprep.subr.bf16.mxu0 0
  %144 = vmatpush1.bf16.msra.mxu0 0
  %145 = vmatprep.subr.bf16.mxu0 0
  %146 = vmatpush1.bf16.msra.mxu0 0
  %147 = vmatprep.subr.bf16.mxu0 0
  %148 = vmatpush1.bf16.msra.mxu0 0
  %149 = vmatprep.subr.bf16.mxu0 0
  %150 = vmatpush1.bf16.msra.mxu0 0
  %151 = vmatprep.subr.bf16.mxu0 0
  %152 = vmatpush1.bf16.msra.mxu0 0
  %153 = vmatprep.subr.bf16.mxu0 0
  %154 = vmatpush1.bf16.msra.mxu0 0
  %155 = vmatprep.mubr.bf16.mxu0 0
  %156 = vmatmul.mubr.bf16.gmra.mrb[0].mxu0 %v121
  %v157 = vpop.f32.mrb[0].mxu0
  %v158 = vadd.f32 %v103, %v157
  %v159 = vpop.f32.mrb[0].mxu0
  %v160 = vpop.f32.mrb[0].mxu0
  %v161 = vadd.f32 %v106, %v160
  %v162 = vpop.f32.mrb[0].mxu0
  %163 = vdwg.mxu0
  %v164 = vld [vmem:[%s3] sm:$0xf]
  %v165 = vld [vmem:[%s3 + $0x4] sm:$0xf]
  %v166 = vld [vmem:[%s6] sm:$0xf]
  %v167 = vld [vmem:[%s6 + $0x4] sm:$0xf]
  %v170 = vunpack.c.l.b16 %v164
  %v171 = vunpack.c.l.b16 %v165
  %v172 = vpack.c.b16 %v171, %v170
  %v175 = vunpack.c.l.b16 %v166
  %v176 = vunpack.c.l.b16 %v167
  %v177 = vpack.c.b16 %v176, %v175
  %v180 = vsel %vm64, %v172, 0
  %182 = vmatprep.subr.bf16.mxu0 0
  %183 = vmatpush1.bf16.msra.mxu0 %v177
  %184 = vmatprep.subr.bf16.mxu0 0
  %185 = vmatpush1.bf16.msra.mxu0 0
  %186 = vmatprep.subr.bf16.mxu0 0
  %187 = vmatpush1.bf16.msra.mxu0 0
  %188 = vmatprep.subr.bf16.mxu0 0
  %189 = vmatpush1.bf16.msra.mxu0 0
  %190 = vmatprep.subr.bf16.mxu0 0
  %191 = vmatpush1.bf16.msra.mxu0 0
  %192 = vmatprep.subr.bf16.mxu0 0
  %193 = vmatpush1.bf16.msra.mxu0 0
  %194 = vmatprep.subr.bf16.mxu0 0
  %195 = vmatpush1.bf16.msra.mxu0 0
  %196 = vmatprep.subr.bf16.mxu0 0
  %197 = vmatpush1.bf16.msra.mxu0 0
  %198 = vmatprep.subr.bf16.mxu0 0
  %199 = vmatpush1.bf16.msra.mxu0 0
  %200 = vmatprep.subr.bf16.mxu0 0
  %201 = vmatpush1.bf16.msra.mxu0 0
  %202 = vmatprep.subr.bf16.mxu0 0
  %203 = vmatpush1.bf16.msra.mxu0 0
  %204 = vmatprep.subr.bf16.mxu0 0
  %205 = vmatpush1.bf16.msra.mxu0 0
  %206 = vmatprep.subr.bf16.mxu0 0
  %207 = vmatpush1.bf16.msra.mxu0 0
  %208 = vmatprep.subr.bf16.mxu0 0
  %209 = vmatpush1.bf16.msra.mxu0 0
  %210 = vmatprep.subr.bf16.mxu0 0
  %211 = vmatpush1.bf16.msra.mxu0 0
  %212 = vmatprep.subr.bf16.mxu0 0
  %213 = vmatpush1.bf16.msra.mxu0 0
  %214 = vmatprep.mubr.bf16.mxu0 0
  %215 = vmatmul.mubr.bf16.gmra.mrb[0].mxu0 %v180
  %v216 = vpop.f32.mrb[0].mxu0
  %v217 = vadd.f32 0.0, %v216
  %v218 = vpop.f32.mrb[0].mxu0
  %v219 = vpop.f32.mrb[0].mxu0
  %v220 = vadd.f32 0.0, %v219
  %v221 = vpop.f32.mrb[0].mxu0
  %222 = vdwg.mxu0
  %v223 = vadd.f32 %v158, %v217
  %v224 = vadd.f32 %v161, %v220
  %v225 = vld [vmem:[%s7] sm:$0x1]
  %v227 = vlaneseq
  %v228 = vshrl.u32 %v227, 7
  %v229 = vsub.s32 0, %v228
  %v230 = vrot.slane %v225, %v229
  %v232 = vadd.f32 %v223, %v230
  %v233 = vadd.f32 %v224, %v230
  %v234 = vld [vmem:[%s0] sm:$0xf]
  %v235 = vld [vmem:[%s0 + $0x4] sm:$0xf]
  %v236 = vld [vmem:[%s8] sm:$0xf]
  %v237 = vld [vmem:[%s8 + $0x4] sm:$0xf]
  %v238 = vld [vmem:[%s8 + $0x8] sm:$0xf]
  %v239 = vld [vmem:[%s8 + $0xc] sm:$0xf]
  %v240 = vld [vmem:[%s8 + $0x10] sm:$0xf]
  %v241 = vld [vmem:[%s8 + $0x14] sm:$0xf]
  %v242 = vpack.c.bf16 %v233, %v232
  %v243 = vld [vmem:[%s9] sm:$0xf]
  %v244 = vld [vmem:[%s9 + $0x4] sm:$0xf]
  %v245 = vld [vmem:[%s9 + $0x8] sm:$0xf]
  %v246 = vld [vmem:[%s9 + $0xc] sm:$0xf]
  %v247 = vld [vmem:[%s9 + $0x10] sm:$0xf]
  %v248 = vld [vmem:[%s9 + $0x14] sm:$0xf]
  %v255 = vunpack.c.l.b16 %v243
  %v256 = vunpack.c.l.b16 %v244
  %v257 = vunpack.c.l.b16 %v245
  %v258 = vunpack.c.l.b16 %v246
  %v259 = vunpack.c.l.b16 %v247
  %v260 = vunpack.c.l.b16 %v248
  %v261 = vpack.c.b16 %v256, %v255
  %v262 = vpack.c.b16 %v258, %v257
  %v263 = vpack.c.b16 %v260, %v259
  %vm267 = vcmask 392192
  %v269 = vsel %vm267, %v242, 0
  %271 = vmatprep.subr.bf16.mxu0 0
  %272 = vmatpush1.bf16.msra.mxu0 %v261
  %273 = vmatprep.subr.bf16.mxu0 0
  %274 = vmatpush1.bf16.msra.mxu0 %v262
  %275 = vmatprep.subr.bf16.mxu0 0
  %276 = vmatpush1.bf16.msra.mxu0 %v263
  %277 = vmatprep.subr.bf16.mxu0 0
  %278 = vmatpush1.bf16.msra.mxu0 0
  %279 = vmatprep.subr.bf16.mxu0 0
  %280 = vmatpush1.bf16.msra.mxu0 0
  %281 = vmatprep.subr.bf16.mxu0 0
  %282 = vmatpush1.bf16.msra.mxu0 0
  %283 = vmatprep.subr.bf16.mxu0 0
  %284 = vmatpush1.bf16.msra.mxu0 0
  %285 = vmatprep.subr.bf16.mxu0 0
  %286 = vmatpush1.bf16.msra.mxu0 0
  %287 = vmatprep.subr.bf16.mxu0 0
  %288 = vmatpush1.bf16.msra.mxu0 0
  %289 = vmatprep.subr.bf16.mxu0 0
  %290 = vmatpush1.bf16.msra.mxu0 0
  %291 = vmatprep.subr.bf16.mxu0 0
  %292 = vmatpush1.bf16.msra.mxu0 0
  %293 = vmatprep.subr.bf16.mxu0 0
  %294 = vmatpush1.bf16.msra.mxu0 0
  %295 = vmatprep.subr.bf16.mxu0 0
  %296 = vmatpush1.bf16.msra.mxu0 0
  %297 = vmatprep.subr.bf16.mxu0 0
  %298 = vmatpush1.bf16.msra.mxu0 0
  %299 = vmatprep.subr.bf16.mxu0 0
  %300 = vmatpush1.bf16.msra.mxu0 0
  %301 = vmatprep.subr.bf16.mxu0 0
  %302 = vmatpush1.bf16.msra.mxu0 0
  %303 = vmatprep.mubr.bf16.mxu0 0
  %304 = vmatmul.mubr.bf16.gmra.mrb[0].mxu0 %v269
  %v305 = vpop.f32.mrb[0].mxu0
  %v306 = vadd.f32 0.0, %v305
  %v307 = vpop.f32.mrb[0].mxu0
  %v308 = vpop.f32.mrb[0].mxu0
  %v309 = vadd.f32 0.0, %v308
  %v310 = vpop.f32.mrb[0].mxu0
  %311 = vdwg.mxu0
  %v314 = vunpack.c.l.b16 %v234
  %v315 = vunpack.c.l.b16 %v235
  %v316 = vpack.c.b16 %v315, %v314
  %v323 = vunpack.c.l.b16 %v236
  %v324 = vunpack.c.l.b16 %v237
  %v325 = vunpack.c.l.b16 %v238
  %v326 = vunpack.c.l.b16 %v239
  %v327 = vunpack.c.l.b16 %v240
  %v328 = vunpack.c.l.b16 %v241
  %v329 = vpack.c.b16 %v324, %v323
  %v330 = vpack.c.b16 %v326, %v325
  %v331 = vpack.c.b16 %v328, %v327
  %v336 = vsel %vm267, %v316, 0
  %338 = vmatprep.subr.bf16.mxu0 0
  %339 = vmatpush1.bf16.msra.mxu0 %v329
  %340 = vmatprep.subr.bf16.mxu0 0
  %341 = vmatpush1.bf16.msra.mxu0 %v330
  %342 = vmatprep.subr.bf16.mxu0 0
  %343 = vmatpush1.bf16.msra.mxu0 %v331
  %344 = vmatprep.subr.bf16.mxu0 0
  %345 = vmatpush1.bf16.msra.mxu0 0
  %346 = vmatprep.subr.bf16.mxu0 0
  %347 = vmatpush1.bf16.msra.mxu0 0
  %348 = vmatprep.subr.bf16.mxu0 0
  %349 = vmatpush1.bf16.msra.mxu0 0
  %350 = vmatprep.subr.bf16.mxu0 0
  %351 = vmatpush1.bf16.msra.mxu0 0
  %352 = vmatprep.subr.bf16.mxu0 0
  %353 = vmatpush1.bf16.msra.mxu0 0
  %354 = vmatprep.subr.bf16.mxu0 0
  %355 = vmatpush1.bf16.msra.mxu0 0
  %356 = vmatprep.subr.bf16.mxu0 0
  %357 = vmatpush1.bf16.msra.mxu0 0
  %358 = vmatprep.subr.bf16.mxu0 0
  %359 = vmatpush1.bf16.msra.mxu0 0
  %360 = vmatprep.subr.bf16.mxu0 0
  %361 = vmatpush1.bf16.msra.mxu0 0
  %362 = vmatprep.subr.bf16.mxu0 0
  %363 = vmatpush1.bf16.msra.mxu0 0
  %364 = vmatprep.subr.bf16.mxu0 0
  %365 = vmatpush1.bf16.msra.mxu0 0
  %366 = vmatprep.subr.bf16.mxu0 0
  %367 = vmatpush1.bf16.msra.mxu0 0
  %368 = vmatprep.subr.bf16.mxu0 0
  %369 = vmatpush1.bf16.msra.mxu0 0
  %370 = vmatprep.mubr.bf16.mxu0 0
  %371 = vmatmul.mubr.bf16.gmra.mrb[0].mxu0 %v336
  %v372 = vpop.f32.mrb[0].mxu0
  %v373 = vadd.f32 %v306, %v372
  %v374 = vpop.f32.mrb[0].mxu0
  %v375 = vpop.f32.mrb[0].mxu0
  %v376 = vadd.f32 %v309, %v375
  %v377 = vpop.f32.mrb[0].mxu0
  %378 = vdwg.mxu0
  %v379 = vld [vmem:[%s10] sm:$0x1]
  %v381 = vlaneseq
  %v382 = vshrl.u32 %v381, 7
  %v383 = vsub.s32 0, %v382
  %v384 = vrot.slane %v379, %v383
  %v386 = vadd.f32 %v373, %v384
  %v387 = vadd.f32 %v376, %v384
  %v388 = vld [vmem:[%s11] sm:$0x1]
  %v389 = vld [vmem:[%s12] sm:$0x1]
  %v390 = vsel %vm267, %v386, 0.0
  %391 = vadd.xlane.f32.xlu0 %v390
  %v392 = vpop.xlane.xlu0 %391
  %v393 = vsel %vm267, %v387, 0.0
  %394 = vadd.xlane.f32.xlu0 %v393
  %v395 = vpop.xlane.xlu0 %394
  %v396 = vrcp.pop 48.0
  %v397 = vmul.f32 %v392, %v396
  %v398 = vmul.f32 %v395, %v396
  %v399 = vsub.f32 %v386, %v397
  %v400 = vsub.f32 %v387, %v398
  %v401 = vmul.f32 %v399, %v399
  %v402 = vmul.f32 %v400, %v400
  %v403 = vsel %vm267, %v401, 0.0
  %404 = vadd.xlane.f32.xlu0 %v403
  %v405 = vpop.xlane.xlu0 %404
  %v406 = vsel %vm267, %v402, 0.0
  %407 = vadd.xlane.f32.xlu0 %v406
  %v408 = vpop.xlane.xlu0 %407
  %v409 = vmul.f32 %v405, %v396
  %v410 = vmul.f32 %v408, %v396
  %v411 = vadd.f32 %v409, 1e-12
  %v412 = vadd.f32 %v410, 1e-12
  %v413 = vrsqrt.pop %v411
  %v414 = vrsqrt.pop %v412
  %v415 = vmul.f32 %v399, %v413
  %v416 = vmul.f32 %v400, %v414
  %v418 = vlaneseq
  %v419 = vshrl.u32 %v418, 7
  %v420 = vsub.s32 0, %v419
  %v421 = vrot.slane %v388, %v420
  %v423 = vmul.f32 %v415, %v421
  %v424 = vmul.f32 %v416, %v421
  %v426 = vlaneseq
  %v427 = vshrl.u32 %v426, 7
  %v428 = vsub.s32 0, %v427
  %v429 = vrot.slane %v389, %v428
  %v431 = vadd.f32 %v423, %v429
  %v432 = vadd.f32 %v424, %v429
  %v433 = vpack.c.bf16 %v432, %v431
  %v435 = vunpack.c.l.b16 %v433
  %v436 = vunpack.c.h.b16 %v433
  %v437 = vpack.c.b16 %v435, %v435
  %v438 = vpack.c.b16 %v436, %v436
  %vm441 = vcmask 388096
  %442 = vst.msk [vmem:[%s13] sm:$0xf] %vm441, %v437
  %443 = vst.msk [vmem:[%s13 + $0x4] sm:$0xf] %vm441, %v438
  // Predicated region
  $region54: #{hanzi_forward.11} parent=0 // pred_check
    _
  $region55: #{hanzi_forward.11} parent=0 // pred_check_branch
    %445 = sbr.rel (0) target = $region57
  $region56: #{hanzi_forward.11} parent=0 // pred_region
    _
  $region57: #{hanzi_forward.11} parent=0 // pred_fallthru
    _
  // Predicated region
  $region58: #{hanzi_forward.11} parent=0 // pred_check
    _
  $region59: #{hanzi_forward.11} parent=0 // pred_check_branch
    %447 = sbr.rel (0) target = $region61
  $region60: #{hanzi_forward.11} parent=0 // pred_region
    _
  $region61: #{hanzi_forward.11} parent=0 // pred_fallthru
    _

// kernel: hanzi_forward.12
$region0: #{hanzi_forward.12}
  #allocation0 [shape = 'u32[]', space=smem, size = 0x4, offset = 0x4, fixed_abs, tag = 'smem constant byte address 0x4 - core index']
  #allocation1 [shape = 'u32[144,128]{1,0:T(1,128)}', space=vmem, size = 0x12000, scoped, tag = 'internal scratch']
  %s0 = inlined_call_operand.vmem [shape: bf16[16,48], index: 0, kind: input, shape index: {}]
  %s1 = inlined_call_operand.vmem [shape: bf16[48,48], index: 1, kind: input, shape index: {}]
  %s2 = inlined_call_operand.vmem [shape: f32[1,48], index: 2, kind: input, shape index: {}]
  %s3 = inlined_call_operand.vmem [shape: f32[1,48], index: 3, kind: input, shape index: {}]
  %s4 = inlined_call_operand.vmem [shape: f32[1,48], index: 4, kind: input, shape index: {}]
  %s5 = inlined_call_operand.vmem [shape: bf16[16,48], index: 5, kind: output, shape index: {}]
  %s6 = sld [smem:[#allocation0]]
  $region30: #{hanzi_forward.12} parent=0
    _
  %s8 = ssub.s32 1, %s6
  %s9 = scalar_select 0, %s8, %s6
  // Predicated region
  $region2: #{hanzi_forward.12} parent=0 // pred_check
    _
  $region3: #{hanzi_forward.12} parent=0 // pred_check_branch
    %11 = sbr.rel (0) target = $region5
  $region4: #{hanzi_forward.12} parent=0 // pred_region
    _
  $region5: #{hanzi_forward.12} parent=0 // pred_fallthru
    _
  // Predicated region
  $region6: #{hanzi_forward.12} parent=0 // pred_check
    _
  $region7: #{hanzi_forward.12} parent=0 // pred_check_branch
    %13 = sbr.rel (0) target = $region9
  $region8: #{hanzi_forward.12} parent=0 // pred_region
    _
  $region9: #{hanzi_forward.12} parent=0 // pred_fallthru
    _
  // Predicated region
  $region10: #{hanzi_forward.12} parent=0 // pred_check
    _
  $region11: #{hanzi_forward.12} parent=0 // pred_check_branch
    %15 = sbr.rel (0) target = $region13
  $region12: #{hanzi_forward.12} parent=0 // pred_region
    _
  $region13: #{hanzi_forward.12} parent=0 // pred_fallthru
    _
  // Predicated region
  $region14: #{hanzi_forward.12} parent=0 // pred_check
    _
  $region15: #{hanzi_forward.12} parent=0 // pred_check_branch
    %17 = sbr.rel (0) target = $region17
  $region16: #{hanzi_forward.12} parent=0 // pred_region
    _
  $region17: #{hanzi_forward.12} parent=0 // pred_fallthru
    _
  // Predicated region
  $region18: #{hanzi_forward.12} parent=0 // pred_check
    _
  $region19: #{hanzi_forward.12} parent=0 // pred_check_branch
    %19 = sbr.rel (0) target = $region21
  $region20: #{hanzi_forward.12} parent=0 // pred_region
    _
  $region21: #{hanzi_forward.12} parent=0 // pred_fallthru
    _
  %v21 = vld [vmem:[%s0] sm:$0xf]
  %v22 = vld [vmem:[%s0 + $0x4] sm:$0xf]
  %v23 = vld [vmem:[%s1] sm:$0xf]
  %v24 = vld [vmem:[%s1 + $0x4] sm:$0xf]
  %v25 = vld [vmem:[%s1 + $0x8] sm:$0xf]
  %v26 = vld [vmem:[%s1 + $0xc] sm:$0xf]
  %v27 = vld [vmem:[%s1 + $0x10] sm:$0xf]
  %v28 = vld [vmem:[%s1 + $0x14] sm:$0xf]
  %v29 = vld [vmem:[%s2] sm:$0x1]
  %v31 = vlaneseq
  %v32 = vshrl.u32 %v31, 7
  %v33 = vsub.s32 0, %v32
  %v34 = vrot.slane %v29, %v33
  %v38 = vunpack.c.l.b16 %v21
  %v39 = vunpack.c.l.b16 %v22
  %v40 = vpack.c.b16 %v39, %v38
  %v47 = vunpack.c.l.b16 %v23
  %v48 = vunpack.c.l.b16 %v24
  %v49 = vunpack.c.l.b16 %v25
  %v50 = vunpack.c.l.b16 %v26
  %v51 = vunpack.c.l.b16 %v27
  %v52 = vunpack.c.l.b16 %v28
  %v53 = vpack.c.b16 %v48, %v47
  %v54 = vpack.c.b16 %v50, %v49
  %v55 = vpack.c.b16 %v52, %v51
  %vm59 = vcmask 392192
  %v61 = vsel %vm59, %v40, 0
  %63 = vmatprep.subr.bf16.mxu0 0
  %64 = vmatpush1.bf16.msra.mxu0 %v53
  %65 = vmatprep.subr.bf16.mxu0 0
  %66 = vmatpush1.bf16.msra.mxu0 %v54
  %67 = vmatprep.subr.bf16.mxu0 0
  %68 = vmatpush1.bf16.msra.mxu0 %v55
  %69 = vmatprep.subr.bf16.mxu0 0
  %70 = vmatpush1.bf16.msra.mxu0 0
  %71 = vmatprep.subr.bf16.mxu0 0
  %72 = vmatpush1.bf16.msra.mxu0 0
  %73 = vmatprep.subr.bf16.mxu0 0
  %74 = vmatpush1.bf16.msra.mxu0 0
  %75 = vmatprep.subr.bf16.mxu0 0
  %76 = vmatpush1.bf16.msra.mxu0 0
  %77 = vmatprep.subr.bf16.mxu0 0
  %78 = vmatpush1.bf16.msra.mxu0 0
  %79 = vmatprep.subr.bf16.mxu0 0
  %80 = vmatpush1.bf16.msra.mxu0 0
  %81 = vmatprep.subr.bf16.mxu0 0
  %82 = vmatpush1.bf16.msra.mxu0 0
  %83 = vmatprep.subr.bf16.mxu0 0
  %84 = vmatpush1.bf16.msra.mxu0 0
  %85 = vmatprep.subr.bf16.mxu0 0
  %86 = vmatpush1.bf16.msra.mxu0 0
  %87 = vmatprep.subr.bf16.mxu0 0
  %88 = vmatpush1.bf16.msra.mxu0 0
  %89 = vmatprep.subr.bf16.mxu0 0
  %90 = vmatpush1.bf16.msra.mxu0 0
  %91 = vmatprep.subr.bf16.mxu0 0
  %92 = vmatpush1.bf16.msra.mxu0 0
  %93 = vmatprep.subr.bf16.mxu0 0
  %94 = vmatpush1.bf16.msra.mxu0 0
  %95 = vmatprep.mubr.bf16.mxu0 0
  %96 = vmatmul.mubr.bf16.gmra.mrb[0].mxu0 %v61
  %v97 = vpop.f32.mrb[0].mxu0
  %v98 = vadd.f32 %v34, %v97
  %v99 = vpop.f32.mrb[0].mxu0
  %v100 = vpop.f32.mrb[0].mxu0
  %v101 = vadd.f32 %v34, %v100
  %v102 = vpop.f32.mrb[0].mxu0
  %103 = vdwg.mxu0
  %v104 = vmul.f32 %v98, %v98
  %v105 = vmul.f32 %v101, %v101
  %v106 = vmul.f32 %v98, %v104
  %v107 = vmul.f32 %v101, %v105
  %v108 = vmul.f32 %v106, 0.044715
  %v109 = vmul.f32 %v107, 0.044715
  %v110 = vadd.f32 %v98, %v108
  %v111 = vadd.f32 %v101, %v109
  %v112 = vmul.f32 %v110, 0.7978846
  %v113 = vmul.f32 %v111, 0.7978846
  %v114 = vtanh.pop %v112
  %v115 = vtanh.pop %v113
  %v116 = vadd.f32 %v114, 1.0
  %v117 = vadd.f32 %v115, 1.0
  %v118 = vmul.f32 %v116, 0.5
  %v119 = vmul.f32 %v117, 0.5
  %v120 = vmul.f32 %v98, %v118
  %v121 = vmul.f32 %v101, %v119
  %v122 = vld [vmem:[%s3] sm:$0x1]
  %v123 = vld [vmem:[%s4] sm:$0x1]
  %v124 = vsel %vm59, %v120, 0.0
  %125 = vadd.xlane.f32.xlu0 %v124
  %v126 = vpop.xlane.xlu0 %125
  %v127 = vsel %vm59, %v121, 0.0
  %128 = vadd.xlane.f32.xlu0 %v127
  %v129 = vpop.xlane.xlu0 %128
  %v130 = vrcp.pop 48.0
  %v131 = vmul.f32 %v126, %v130
  %v132 = vmul.f32 %v129, %v130
  %v133 = vsub.f32 %v120, %v131
  %v134 = vsub.f32 %v121, %v132
  %v135 = vmul.f32 %v133, %v133
  %v136 = vmul.f32 %v134, %v134
  %v137 = vsel %vm59, %v135, 0.0
  %138 = vadd.xlane.f32.xlu0 %v137
  %v139 = vpop.xlane.xlu0 %138
  %v140 = vsel %vm59, %v136, 0.0
  %141 = vadd.xlane.f32.xlu0 %v140
  %v142 = vpop.xlane.xlu0 %141
  %v143 = vmul.f32 %v139, %v130
  %v144 = vmul.f32 %v142, %v130
  %v145 = vadd.f32 %v143, 1e-12
  %v146 = vadd.f32 %v144, 1e-12
  %v147 = vrsqrt.pop %v145
  %v148 = vrsqrt.pop %v146
  %v149 = vmul.f32 %v133, %v147
  %v150 = vmul.f32 %v134, %v148
  %v152 = vlaneseq
  %v153 = vshrl.u32 %v152, 7
  %v154 = vsub.s32 0, %v153
  %v155 = vrot.slane %v122, %v154
  %v157 = vmul.f32 %v149, %v155
  %v158 = vmul.f32 %v150, %v155
  %v160 = vlaneseq
  %v161 = vshrl.u32 %v160, 7
  %v162 = vsub.s32 0, %v161
  %v163 = vrot.slane %v123, %v162
  %v165 = vadd.f32 %v157, %v163
  %v166 = vadd.f32 %v158, %v163
  %v167 = vpack.c.bf16 %v166, %v165
  %v169 = vunpack.c.l.b16 %v167
  %v170 = vunpack.c.h.b16 %v167
  %v171 = vpack.c.b16 %v169, %v169
  %v172 = vpack.c.b16 %v170, %v170
  %vm175 = vcmask 388096
  %176 = vst.msk [vmem:[%s5] sm:$0xf] %vm175, %v171
  %177 = vst.msk [vmem:[%s5 + $0x4] sm:$0xf] %vm175, %v172
  // Predicated region
  $region22: #{hanzi_forward.12} parent=0 // pred_check
    _
  $region23: #{hanzi_forward.12} parent=0 // pred_check_branch
    %179 = sbr.rel (0) target = $region25
  $region24: #{hanzi_forward.12} parent=0 // pred_region
    _
  $region25: #{hanzi_forward.12} parent=0 // pred_fallthru
    _
  // Predicated region
  $region26: #{hanzi_forward.12} parent=0 // pred_check
    _
  $region27: #{hanzi_forward.12} parent=0 // pred_check_branch
    %181 = sbr.rel (0) target = $region29
  $region28: #{hanzi_forward.12} parent=0 // pred_region
    _
  $region29: #{hanzi_forward.12} parent=0 // pred_fallthru
    _

</llo_original>
